<compile_context>
chip_gen: v7x
topology: tpu7x:2x2x1
jax: 0.10.0
libtpu: 0.0.40
codegen_flags: <defaults>
</compile_context>

<pallas_src>
import functools

import jax
import jax.numpy as jnp
from jax.experimental import pallas as pl
from jax.experimental.pallas import tpu as pltpu

BN_EPS = 1e-5
VMEM_LIMIT_BYTES = 32 * 1024 * 1024  # safe on v5e/v6e/v7x; usage is << this


# --------------------------------------------------------------------------
# Kernels
# --------------------------------------------------------------------------
def _stats1_kernel(x_ref, w1_ref, sum1_ref, sq1_ref):
    """Pass 1: accumulate per-feature sum / sum-of-squares of h1 = x @ W1."""
    @pl.when(pl.program_id(0) == 0)
    def _():
        sum1_ref[...] = jnp.zeros_like(sum1_ref)
        sq1_ref[...] = jnp.zeros_like(sq1_ref)

    h1 = jnp.dot(x_ref[...], w1_ref[...], preferred_element_type=jnp.float32)
    # Padded batch rows are exact zeros -> contribute nothing (Linear has no bias).
    sum1_ref[...] += jnp.sum(h1, axis=0, keepdims=True)
    sq1_ref[...] += jnp.sum(h1 * h1, axis=0, keepdims=True)


def _stats2_kernel(x_ref, w1_ref, s1_ref, t1_ref, w2_ref, sum2_ref, sq2_ref,
                   *, n_valid):
    """Pass 2: accumulate batch stats of h2 = relu(bn1(x@W1)) @ W2."""
    i = pl.program_id(0)
    tb = x_ref.shape[0]

    @pl.when(i == 0)
    def _():
        sum2_ref[...] = jnp.zeros_like(sum2_ref)
        sq2_ref[...] = jnp.zeros_like(sq2_ref)

    h1 = jnp.dot(x_ref[...], w1_ref[...], preferred_element_type=jnp.float32)
    h1n = jnp.maximum(h1 * s1_ref[...] + t1_ref[...], 0.0)          # fused BN + ReLU
    h2 = jnp.dot(h1n.astype(jnp.bfloat16), w2_ref[...],
                 preferred_element_type=jnp.float32)

    # Mask padded batch rows so they do not pollute the layer-2 statistics.
    row = jax.lax.broadcasted_iota(jnp.int32, (tb, 1), 0) + i * tb
    h2 = jnp.where(row < n_valid, h2, 0.0)

    sum2_ref[...] += jnp.sum(h2, axis=0, keepdims=True)
    sq2_ref[...] += jnp.sum(h2 * h2, axis=0, keepdims=True)


def _decoder_kernel(x_ref, w1_ref, s1_ref, t1_ref, w2_ref, s2_ref, t2_ref,
                    w3_ref, o_ref):
    """Pass 3: normalize + final projection; lane-dense (tb//128, 128) output."""
    h1 = jnp.dot(x_ref[...], w1_ref[...], preferred_element_type=jnp.float32)
    h1n = jnp.maximum(h1 * s1_ref[...] + t1_ref[...], 0.0)
    h2 = jnp.dot(h1n.astype(jnp.bfloat16), w2_ref[...],
                 preferred_element_type=jnp.float32)
    h2n = jnp.maximum(h2 * s2_ref[...] + t2_ref[...], 0.0)
    # Final Linear(32 -> 1): VPU multiply + cross-lane reduce (skip an N=1 MXU pass).
    vals = jnp.sum(h2n * w3_ref[...], axis=-1)           # (tb,)
    o_ref[...] = vals.reshape(o_ref.shape)               # (tb//128, 128), lane-dense


# --------------------------------------------------------------------------
# Wrapper
# --------------------------------------------------------------------------
def _round_up(n, m):
    return ((n + m - 1) // m) * m


def _finalize_bn(s, sq, n, gamma, beta):
    """mean/biased-var -> fused (scale, shift). Tiny (64 / 32 element) XLA ops."""
    mean = s / n
    var = jnp.maximum(sq / n - mean * mean, 0.0)          # guard cancellation
    scale = gamma * jax.lax.rsqrt(var + BN_EPS)
    shift = beta - mean * scale
    return scale, shift


def decoder_forward(x, params, *, block_rows=2048):
    """x: (B, 128) float32. Returns (B,) float32. Training-mode BatchNorm."""
    B, D = x.shape
    assert block_rows % 1024 == 0  # keeps (tb//128, 128) output blocks legal

    # Batch tiling: lane-aligned tile; VMEM bounded independent of B.
    tb = _round_up(B, 128) if B <= block_rows else block_rows
    Bp = _round_up(B, tb)
    nb = Bp // tb

    # bf16 matmul operands (halves HBM read bytes on x); BN math stays f32.
    xp = jnp.pad(x, ((0, Bp - B), (0, 0))).astype(jnp.bfloat16)
    w1 = params["w1"].astype(jnp.bfloat16)                 # (D, 64)
    w2 = params["w2"].astype(jnp.bfloat16)                 # (64, 32)
    w3 = params["w3"].reshape(1, 32).astype(jnp.float32)   # (1, 32) row
    g1, b1 = params["g1"], params["b1"]                    # (1, 64) f32
    g2, b2 = params["g2"], params["b2"]                    # (1, 32) f32

    x_spec = pl.BlockSpec((tb, D), lambda i: (i, 0))
    const = lambda shape: pl.BlockSpec(shape, lambda i: (0,) * len(shape))

    cp_reduce = pltpu.CompilerParams(
        dimension_semantics=("arbitrary",), vmem_limit_bytes=VMEM_LIMIT_BYTES)
    cp_parallel = pltpu.CompilerParams(
        dimension_semantics=("parallel",), vmem_limit_bytes=VMEM_LIMIT_BYTES)

    # ---- pass 1: layer-1 batch statistics (reduction over batch tiles) ----
    sum1, sq1 = pl.pallas_call(
        _stats1_kernel,
        out_shape=(jax.ShapeDtypeStruct((1, 64), jnp.float32),
                   jax.ShapeDtypeStruct((1, 64), jnp.float32)),
        grid_spec=pltpu.PrefetchScalarGridSpec(
            num_scalar_prefetch=0, grid=(nb,),
            in_specs=[x_spec, const((D, 64))],
            out_specs=[const((1, 64)), const((1, 64))]),
        compiler_params=cp_reduce,
    )(xp, w1)
    scale1, shift1 = _finalize_bn(sum1, sq1, B, g1, b1)

    # ---- pass 2: layer-2 batch statistics ----
    sum2, sq2 = pl.pallas_call(
        functools.partial(_stats2_kernel, n_valid=B),
        out_shape=(jax.ShapeDtypeStruct((1, 32), jnp.float32),
                   jax.ShapeDtypeStruct((1, 32), jnp.float32)),
        grid_spec=pltpu.PrefetchScalarGridSpec(
            num_scalar_prefetch=0, grid=(nb,),
            in_specs=[x_spec, const((D, 64)), const((1, 64)), const((1, 64)),
                      const((64, 32))],
            out_specs=[const((1, 32)), const((1, 32))]),
        compiler_params=cp_reduce,
    )(xp, w1, scale1, shift1, w2)
    scale2, shift2 = _finalize_bn(sum2, sq2, B, g2, b2)

    # ---- pass 3: normalize + project; "parallel" batch axis, lane-dense out ----
    out2d = pl.pallas_call(
        _decoder_kernel,
        out_shape=jax.ShapeDtypeStruct((Bp // 128, 128), jnp.float32),
        grid_spec=pltpu.PrefetchScalarGridSpec(
            num_scalar_prefetch=0, grid=(nb,),
            in_specs=[x_spec, const((D, 64)), const((1, 64)), const((1, 64)),
                      const((64, 32)), const((1, 32)), const((1, 32)),
                      const((1, 32))],
            out_specs=pl.BlockSpec((tb // 128, 128), lambda i: (i, 0))),
        compiler_params=cp_parallel,
    )(xp, w1, scale1, shift1, w2, scale2, shift2, w3)

    return out2d.reshape(-1)[:B]   # un-pad + squeeze(-1)


# --------------------------------------------------------------------------
# Params / reference
# --------------------------------------------------------------------------
def init_params(key, D=128):
    """Deterministic synthetic init. Linear weights stored as (in, out) fp32."""
    k1, k2, k3, k4, k5, k6, k7 = jax.random.split(key, 7)
    return {
        "w1": jax.random.normal(k1, (D, 64), jnp.float32) * (1.0 / jnp.sqrt(D)),
        "g1": jax.random.normal(k2, (1, 64), jnp.float32) * 0.1 + 1.0,
        "b1": jax.random.normal(k3, (1, 64), jnp.float32) * 0.1,
        "w2": jax.random.normal(k4, (64, 32), jnp.float32) * (1.0 / jnp.sqrt(64.0)),
        "g2": jax.random.normal(k5, (1, 32), jnp.float32) * 0.1 + 1.0,
        "b2": jax.random.normal(k6, (1, 32), jnp.float32) * 0.1,
        "w3": jax.random.normal(k7, (32, 1), jnp.float32) * (1.0 / jnp.sqrt(32.0)),
    }


def reference_forward(x, p):
    """Pure-JAX fp32 reference of the PyTorch forward (training-mode BN)."""
    def bn_relu(h, g, b):
        m = jnp.mean(h, axis=0, keepdims=True)
        v = jnp.mean((h - m) ** 2, axis=0, keepdims=True)
        return jnp.maximum((h - m) / jnp.sqrt(v + BN_EPS) * g + b, 0.0)

    h = bn_relu(x @ p["w1"], p["g1"], p["b1"])
    h = bn_relu(h @ p["w2"], p["g2"], p["b2"])
    return (h @ p["w3"])[:, 0]


# --------------------------------------------------------------------------
if __name__ == "__main__":
    key = jax.random.PRNGKey(0)
    kx, kp = jax.random.split(key)

    # Small, non-multiple-of-128 batch to exercise padding + stats masking.
    B, D = 96, 128
    x = jax.random.normal(kx, (B, D), jnp.float32)
    params = init_params(kp, D)

    fwd = jax.jit(decoder_forward)
    out = jax.block_until_ready(fwd(x, params))
    ref = reference_forward(x, params)

    assert out.shape == (B,), out.shape
    # bf16 matmul operands -> relaxed tolerance vs. the pure-fp32 reference.
    assert jnp.allclose(out, ref, atol=5e-2, rtol=5e-2), \
        float(jnp.max(jnp.abs(out - ref)))

    print("KERNEL_OK")
</pallas_src>

<mosaic_0001>
module attributes {stable_mosaic.version = 11 : i64} {
  func.func @_stats2_kernel(%arg0: i32, %arg1: memref<128x128xbf16, #tpu.memory_space<vmem>>, %arg2: memref<128x64xbf16, #tpu.memory_space<vmem>>, %arg3: memref<1x64xf32, #tpu.memory_space<vmem>>, %arg4: memref<1x64xf32, #tpu.memory_space<vmem>>, %arg5: memref<64x32xbf16, #tpu.memory_space<vmem>>, %arg6: memref<1x32xf32, #tpu.memory_space<vmem>>, %arg7: memref<1x32xf32, #tpu.memory_space<vmem>>) attributes {dimension_semantics = [#tpu.dimension_semantics<arbitrary>], iteration_bounds = array<i64: 1>, scalar_prefetch = 0 : i64, scratch_operands = 0 : i64, tpu.core_type = #tpu.core_type<tc>, window_params = [{transform_indices = @transform_0, window_bounds = array<i64: 128, 128>}, {pipeline_mode = #tpu.pipeline_mode<synchronous>, transform_indices = @transform_1, window_bounds = array<i64: 128, 64>}, {pipeline_mode = #tpu.pipeline_mode<synchronous>, transform_indices = @transform_2, window_bounds = array<i64: 1, 64>}, {pipeline_mode = #tpu.pipeline_mode<synchronous>, transform_indices = @transform_3, window_bounds = array<i64: 1, 64>}, {pipeline_mode = #tpu.pipeline_mode<synchronous>, transform_indices = @transform_4, window_bounds = array<i64: 64, 32>}, {pipeline_mode = #tpu.pipeline_mode<synchronous>, transform_indices = @transform_5, window_bounds = array<i64: 1, 32>}, {pipeline_mode = #tpu.pipeline_mode<synchronous>, transform_indices = @transform_6, window_bounds = array<i64: 1, 32>}]} {
    %c0_i32 = arith.constant 0 : i32
    %0 = arith.cmpi eq, %arg0, %c0_i32 : i32
    %1 = arith.extui %0 : i1 to i32
    %c0_i32_0 = arith.constant 0 : i32
    %2 = arith.cmpi ne, %1, %c0_i32_0 : i32
    scf.if %2 {
      %cst_23 = arith.constant 0.000000e+00 : f32
      %38 = vector.broadcast %cst_23 : f32 to vector<1x32xf32>
      %c0_24 = arith.constant 0 : index
      %c0_25 = arith.constant 0 : index
      %39 = vector.load %arg6[%c0_24, %c0_25] : memref<1x32xf32, #tpu.memory_space<vmem>>, vector<1x32xf32>
      tpu.vector_store %arg6[%c0_24, %c0_25], %38 {strides = array<i32>} : memref<1x32xf32, #tpu.memory_space<vmem>>, vector<1x32xf32>,
      %cst_26 = arith.constant 0.000000e+00 : f32
      %40 = vector.broadcast %cst_26 : f32 to vector<1x32xf32>
      %c0_27 = arith.constant 0 : index
      %c0_28 = arith.constant 0 : index
      %41 = vector.load %arg7[%c0_27, %c0_28] : memref<1x32xf32, #tpu.memory_space<vmem>>, vector<1x32xf32>
      tpu.vector_store %arg7[%c0_27, %c0_28], %40 {strides = array<i32>} : memref<1x32xf32, #tpu.memory_space<vmem>>, vector<1x32xf32>,
    } else {
    }
    %c0 = arith.constant 0 : index
    %c0_1 = arith.constant 0 : index
    %3 = vector.load %arg1[%c0, %c0_1] : memref<128x128xbf16, #tpu.memory_space<vmem>>, vector<128x128xbf16>
    %c0_2 = arith.constant 0 : index
    %c0_3 = arith.constant 0 : index
    %4 = vector.load %arg2[%c0_2, %c0_3] : memref<128x64xbf16, #tpu.memory_space<vmem>>, vector<128x64xbf16>
    %cst = arith.constant dense<0.000000e+00> : vector<128x64xf32>
    %5 = tpu.matmul %3, %4, %cst {dimension_numbers = #tpu.dot_dimension_numbers<[1], [0], [0], [1], [0, 0, 1, 1], [], []>} : vector<128x128xbf16>, vector<128x64xbf16>, vector<128x64xf32> -> vector<128x64xf32>
    %c0_4 = arith.constant 0 : index
    %c0_5 = arith.constant 0 : index
    %6 = vector.load %arg3[%c0_4, %c0_5] : memref<1x64xf32, #tpu.memory_space<vmem>>, vector<1x64xf32>
    %7 = vector.broadcast %6 : vector<1x64xf32> to vector<128x64xf32>
    %8 = arith.mulf %5, %7 : vector<128x64xf32>
    %c0_6 = arith.constant 0 : index
    %c0_7 = arith.constant 0 : index
    %9 = vector.load %arg4[%c0_6, %c0_7] : memref<1x64xf32, #tpu.memory_space<vmem>>, vector<1x64xf32>
    %10 = vector.broadcast %9 : vector<1x64xf32> to vector<128x64xf32>
    %11 = arith.addf %8, %10 : vector<128x64xf32>
    %cst_8 = arith.constant 0.000000e+00 : f32
    %12 = vector.broadcast %cst_8 : f32 to vector<128x64xf32>
    %13 = arith.maximumf %11, %12 : vector<128x64xf32>
    %14 = arith.truncf %13 : vector<128x64xf32> to vector<128x64xbf16>
    %c0_9 = arith.constant 0 : index
    %c0_10 = arith.constant 0 : index
    %15 = vector.load %arg5[%c0_9, %c0_10] : memref<64x32xbf16, #tpu.memory_space<vmem>>, vector<64x32xbf16>
    %cst_11 = arith.constant dense<0.000000e+00> : vector<128x32xf32>
    %16 = tpu.matmul %14, %15, %cst_11 {dimension_numbers = #tpu.dot_dimension_numbers<[1], [0], [0], [1], [0, 0, 1, 1], [], []>} : vector<128x64xbf16>, vector<64x32xbf16>, vector<128x32xf32> -> vector<128x32xf32>
    %17 = tpu.iota {dimensions = array<i32: 0>} : vector<128x1xi32>
    %c128_i32 = arith.constant 128 : i32
    %18 = arith.muli %arg0, %c128_i32 : i32
    %19 = vector.broadcast %18 : i32 to vector<128x1xi32>
    %20 = arith.addi %17, %19 : vector<128x1xi32>
    %c96_i32 = arith.constant 96 : i32
    %21 = vector.broadcast %c96_i32 : i32 to vector<128x1xi32>
    %22 = arith.cmpi slt, %20, %21 : vector<128x1xi32>
    %cst_12 = arith.constant 0.000000e+00 : f32
    %23 = vector.shape_cast %22 : vector<128x1xi1> to vector<128x1xi1>
    %24 = vector.broadcast %23 : vector<128x1xi1> to vector<128x32xi1>
    %25 = vector.broadcast %cst_12 : f32 to vector<128x32xf32>
    %26 = arith.select %24, %16, %25 : vector<128x32xi1>, vector<128x32xf32>
    %c0_13 = arith.constant 0 : index
    %c0_14 = arith.constant 0 : index
    %27 = vector.load %arg6[%c0_13, %c0_14] : memref<1x32xf32, #tpu.memory_space<vmem>>, vector<1x32xf32>
    %cst_15 = arith.constant dense<0.000000e+00> : vector<32xf32>
    %28 = vector.multi_reduction <add>, %26, %cst_15 [0] : vector<128x32xf32> to vector<32xf32>
    %29 = vector.shape_cast %28 : vector<32xf32> to vector<1x32xf32>
    %30 = arith.addf %27, %29 : vector<1x32xf32>
    %c0_16 = arith.constant 0 : index
    %c0_17 = arith.constant 0 : index
    %31 = vector.load %arg6[%c0_16, %c0_17] : memref<1x32xf32, #tpu.memory_space<vmem>>, vector<1x32xf32>
    tpu.vector_store %arg6[%c0_16, %c0_17], %30 {strides = array<i32>} : memref<1x32xf32, #tpu.memory_space<vmem>>, vector<1x32xf32>,
    %c0_18 = arith.constant 0 : index
    %c0_19 = arith.constant 0 : index
    %32 = vector.load %arg7[%c0_18, %c0_19] : memref<1x32xf32, #tpu.memory_space<vmem>>, vector<1x32xf32>
    %33 = arith.mulf %26, %26 : vector<128x32xf32>
    %cst_20 = arith.constant dense<0.000000e+00> : vector<32xf32>
    %34 = vector.multi_reduction <add>, %33, %cst_20 [0] : vector<128x32xf32> to vector<32xf32>
    %35 = vector.shape_cast %34 : vector<32xf32> to vector<1x32xf32>
    %36 = arith.addf %32, %35 : vector<1x32xf32>
    %c0_21 = arith.constant 0 : index
    %c0_22 = arith.constant 0 : index
    %37 = vector.load %arg7[%c0_21, %c0_22] : memref<1x32xf32, #tpu.memory_space<vmem>>, vector<1x32xf32>
    tpu.vector_store %arg7[%c0_21, %c0_22], %36 {strides = array<i32>} : memref<1x32xf32, #tpu.memory_space<vmem>>, vector<1x32xf32>,
    return
  }
  func.func @transform_0(%arg0: i32) -> (i32, i32) {
    %c0_i32 = arith.constant 0 : i32
    %c0_i32_0 = arith.constant 0 : i32
    return %arg0, %c0_i32 : i32, i32
  }
  func.func @transform_1(%arg0: i32) -> (i32, i32) {
    %c0_i32 = arith.constant 0 : i32
    %c0_i32_0 = arith.constant 0 : i32
    %c0_i32_1 = arith.constant 0 : i32
    return %c0_i32, %c0_i32_0 : i32, i32
  }
  func.func @transform_2(%arg0: i32) -> (i32, i32) {
    %c0_i32 = arith.constant 0 : i32
    %c0_i32_0 = arith.constant 0 : i32
    %c0_i32_1 = arith.constant 0 : i32
    return %c0_i32, %c0_i32_0 : i32, i32
  }
  func.func @transform_3(%arg0: i32) -> (i32, i32) {
    %c0_i32 = arith.constant 0 : i32
    %c0_i32_0 = arith.constant 0 : i32
    %c0_i32_1 = arith.constant 0 : i32
    return %c0_i32, %c0_i32_0 : i32, i32
  }
  func.func @transform_4(%arg0: i32) -> (i32, i32) {
    %c0_i32 = arith.constant 0 : i32
    %c0_i32_0 = arith.constant 0 : i32
    %c0_i32_1 = arith.constant 0 : i32
    return %c0_i32, %c0_i32_0 : i32, i32
  }
  func.func @transform_5(%arg0: i32) -> (i32, i32) {
    %c0_i32 = arith.constant 0 : i32
    %c0_i32_0 = arith.constant 0 : i32
    %c0_i32_1 = arith.constant 0 : i32
    return %c0_i32, %c0_i32_0 : i32, i32
  }
  func.func @transform_6(%arg0: i32) -> (i32, i32) {
    %c0_i32 = arith.constant 0 : i32
    %c0_i32_0 = arith.constant 0 : i32
    %c0_i32_1 = arith.constant 0 : i32
    return %c0_i32, %c0_i32_0 : i32, i32
  }
}

module attributes {stable_mosaic.version = 11 : i64} {
  func.func @_stats1_kernel(%arg0: i32, %arg1: memref<128x128xbf16, #tpu.memory_space<vmem>>, %arg2: memref<128x64xbf16, #tpu.memory_space<vmem>>, %arg3: memref<1x64xf32, #tpu.memory_space<vmem>>, %arg4: memref<1x64xf32, #tpu.memory_space<vmem>>) attributes {dimension_semantics = [#tpu.dimension_semantics<arbitrary>], iteration_bounds = array<i64: 1>, scalar_prefetch = 0 : i64, scratch_operands = 0 : i64, tpu.core_type = #tpu.core_type<tc>, window_params = [{transform_indices = @transform_0, window_bounds = array<i64: 128, 128>}, {pipeline_mode = #tpu.pipeline_mode<synchronous>, transform_indices = @transform_1, window_bounds = array<i64: 128, 64>}, {pipeline_mode = #tpu.pipeline_mode<synchronous>, transform_indices = @transform_2, window_bounds = array<i64: 1, 64>}, {pipeline_mode = #tpu.pipeline_mode<synchronous>, transform_indices = @transform_3, window_bounds = array<i64: 1, 64>}]} {
    %c0_i32 = arith.constant 0 : i32
    %0 = arith.cmpi eq, %arg0, %c0_i32 : i32
    %1 = arith.extui %0 : i1 to i32
    %c0_i32_0 = arith.constant 0 : i32
    %2 = arith.cmpi ne, %1, %c0_i32_0 : i32
    scf.if %2 {
      %cst_14 = arith.constant 0.000000e+00 : f32
      %17 = vector.broadcast %cst_14 : f32 to vector<1x64xf32>
      %c0_15 = arith.constant 0 : index
      %c0_16 = arith.constant 0 : index
      %18 = vector.load %arg3[%c0_15, %c0_16] : memref<1x64xf32, #tpu.memory_space<vmem>>, vector<1x64xf32>
      tpu.vector_store %arg3[%c0_15, %c0_16], %17 {strides = array<i32>} : memref<1x64xf32, #tpu.memory_space<vmem>>, vector<1x64xf32>,
      %cst_17 = arith.constant 0.000000e+00 : f32
      %19 = vector.broadcast %cst_17 : f32 to vector<1x64xf32>
      %c0_18 = arith.constant 0 : index
      %c0_19 = arith.constant 0 : index
      %20 = vector.load %arg4[%c0_18, %c0_19] : memref<1x64xf32, #tpu.memory_space<vmem>>, vector<1x64xf32>
      tpu.vector_store %arg4[%c0_18, %c0_19], %19 {strides = array<i32>} : memref<1x64xf32, #tpu.memory_space<vmem>>, vector<1x64xf32>,
    } else {
    }
    %c0 = arith.constant 0 : index
    %c0_1 = arith.constant 0 : index
    %3 = vector.load %arg1[%c0, %c0_1] : memref<128x128xbf16, #tpu.memory_space<vmem>>, vector<128x128xbf16>
    %c0_2 = arith.constant 0 : index
    %c0_3 = arith.constant 0 : index
    %4 = vector.load %arg2[%c0_2, %c0_3] : memref<128x64xbf16, #tpu.memory_space<vmem>>, vector<128x64xbf16>
    %cst = arith.constant dense<0.000000e+00> : vector<128x64xf32>
    %5 = tpu.matmul %3, %4, %cst {dimension_numbers = #tpu.dot_dimension_numbers<[1], [0], [0], [1], [0, 0, 1, 1], [], []>} : vector<128x128xbf16>, vector<128x64xbf16>, vector<128x64xf32> -> vector<128x64xf32>
    %c0_4 = arith.constant 0 : index
    %c0_5 = arith.constant 0 : index
    %6 = vector.load %arg3[%c0_4, %c0_5] : memref<1x64xf32, #tpu.memory_space<vmem>>, vector<1x64xf32>
    %cst_6 = arith.constant dense<0.000000e+00> : vector<64xf32>
    %7 = vector.multi_reduction <add>, %5, %cst_6 [0] : vector<128x64xf32> to vector<64xf32>
    %8 = vector.shape_cast %7 : vector<64xf32> to vector<1x64xf32>
    %9 = arith.addf %6, %8 : vector<1x64xf32>
    %c0_7 = arith.constant 0 : index
    %c0_8 = arith.constant 0 : index
    %10 = vector.load %arg3[%c0_7, %c0_8] : memref<1x64xf32, #tpu.memory_space<vmem>>, vector<1x64xf32>
    tpu.vector_store %arg3[%c0_7, %c0_8], %9 {strides = array<i32>} : memref<1x64xf32, #tpu.memory_space<vmem>>, vector<1x64xf32>,
    %c0_9 = arith.constant 0 : index
    %c0_10 = arith.constant 0 : index
    %11 = vector.load %arg4[%c0_9, %c0_10] : memref<1x64xf32, #tpu.memory_space<vmem>>, vector<1x64xf32>
    %12 = arith.mulf %5, %5 : vector<128x64xf32>
    %cst_11 = arith.constant dense<0.000000e+00> : vector<64xf32>
    %13 = vector.multi_reduction <add>, %12, %cst_11 [0] : vector<128x64xf32> to vector<64xf32>
    %14 = vector.shape_cast %13 : vector<64xf32> to vector<1x64xf32>
    %15 = arith.addf %11, %14 : vector<1x64xf32>
    %c0_12 = arith.constant 0 : index
    %c0_13 = arith.constant 0 : index
    %16 = vector.load %arg4[%c0_12, %c0_13] : memref<1x64xf32, #tpu.memory_space<vmem>>, vector<1x64xf32>
    tpu.vector_store %arg4[%c0_12, %c0_13], %15 {strides = array<i32>} : memref<1x64xf32, #tpu.memory_space<vmem>>, vector<1x64xf32>,
    return
  }
  func.func @transform_0(%arg0: i32) -> (i32, i32) {
    %c0_i32 = arith.constant 0 : i32
    %c0_i32_0 = arith.constant 0 : i32
    return %arg0, %c0_i32 : i32, i32
  }
  func.func @transform_1(%arg0: i32) -> (i32, i32) {
    %c0_i32 = arith.constant 0 : i32
    %c0_i32_0 = arith.constant 0 : i32
    %c0_i32_1 = arith.constant 0 : i32
    return %c0_i32, %c0_i32_0 : i32, i32
  }
  func.func @transform_2(%arg0: i32) -> (i32, i32) {
    %c0_i32 = arith.constant 0 : i32
    %c0_i32_0 = arith.constant 0 : i32
    %c0_i32_1 = arith.constant 0 : i32
    return %c0_i32, %c0_i32_0 : i32, i32
  }
  func.func @transform_3(%arg0: i32) -> (i32, i32) {
    %c0_i32 = arith.constant 0 : i32
    %c0_i32_0 = arith.constant 0 : i32
    %c0_i32_1 = arith.constant 0 : i32
    return %c0_i32, %c0_i32_0 : i32, i32
  }
}

module attributes {stable_mosaic.version = 11 : i64} {
  func.func @_decoder_kernel(%arg0: i32, %arg1: memref<128x128xbf16, #tpu.memory_space<vmem>>, %arg2: memref<128x64xbf16, #tpu.memory_space<vmem>>, %arg3: memref<1x64xf32, #tpu.memory_space<vmem>>, %arg4: memref<1x64xf32, #tpu.memory_space<vmem>>, %arg5: memref<64x32xbf16, #tpu.memory_space<vmem>>, %arg6: memref<1x32xf32, #tpu.memory_space<vmem>>, %arg7: memref<1x32xf32, #tpu.memory_space<vmem>>, %arg8: memref<1x32xf32, #tpu.memory_space<vmem>>, %arg9: memref<1x128xf32, #tpu.memory_space<vmem>>) attributes {dimension_semantics = [#tpu.dimension_semantics<parallel>], iteration_bounds = array<i64: 1>, scalar_prefetch = 0 : i64, scratch_operands = 0 : i64, tpu.core_type = #tpu.core_type<tc>, window_params = [{transform_indices = @transform_0, window_bounds = array<i64: 128, 128>}, {pipeline_mode = #tpu.pipeline_mode<synchronous>, transform_indices = @transform_1, window_bounds = array<i64: 128, 64>}, {pipeline_mode = #tpu.pipeline_mode<synchronous>, transform_indices = @transform_2, window_bounds = array<i64: 1, 64>}, {pipeline_mode = #tpu.pipeline_mode<synchronous>, transform_indices = @transform_3, window_bounds = array<i64: 1, 64>}, {pipeline_mode = #tpu.pipeline_mode<synchronous>, transform_indices = @transform_4, window_bounds = array<i64: 64, 32>}, {pipeline_mode = #tpu.pipeline_mode<synchronous>, transform_indices = @transform_5, window_bounds = array<i64: 1, 32>}, {pipeline_mode = #tpu.pipeline_mode<synchronous>, transform_indices = @transform_6, window_bounds = array<i64: 1, 32>}, {pipeline_mode = #tpu.pipeline_mode<synchronous>, transform_indices = @transform_7, window_bounds = array<i64: 1, 32>}, {transform_indices = @transform_8, window_bounds = array<i64: 1, 128>}]} {
    %c0 = arith.constant 0 : index
    %c0_0 = arith.constant 0 : index
    %0 = vector.load %arg1[%c0, %c0_0] : memref<128x128xbf16, #tpu.memory_space<vmem>>, vector<128x128xbf16>
    %c0_1 = arith.constant 0 : index
    %c0_2 = arith.constant 0 : index
    %1 = vector.load %arg2[%c0_1, %c0_2] : memref<128x64xbf16, #tpu.memory_space<vmem>>, vector<128x64xbf16>
    %cst = arith.constant dense<0.000000e+00> : vector<128x64xf32>
    %2 = tpu.matmul %0, %1, %cst {dimension_numbers = #tpu.dot_dimension_numbers<[1], [0], [0], [1], [0, 0, 1, 1], [], []>} : vector<128x128xbf16>, vector<128x64xbf16>, vector<128x64xf32> -> vector<128x64xf32>
    %c0_3 = arith.constant 0 : index
    %c0_4 = arith.constant 0 : index
    %3 = vector.load %arg3[%c0_3, %c0_4] : memref<1x64xf32, #tpu.memory_space<vmem>>, vector<1x64xf32>
    %4 = vector.broadcast %3 : vector<1x64xf32> to vector<128x64xf32>
    %5 = arith.mulf %2, %4 : vector<128x64xf32>
    %c0_5 = arith.constant 0 : index
    %c0_6 = arith.constant 0 : index
    %6 = vector.load %arg4[%c0_5, %c0_6] : memref<1x64xf32, #tpu.memory_space<vmem>>, vector<1x64xf32>
    %7 = vector.broadcast %6 : vector<1x64xf32> to vector<128x64xf32>
    %8 = arith.addf %5, %7 : vector<128x64xf32>
    %cst_7 = arith.constant 0.000000e+00 : f32
    %9 = vector.broadcast %cst_7 : f32 to vector<128x64xf32>
    %10 = arith.maximumf %8, %9 : vector<128x64xf32>
    %11 = arith.truncf %10 : vector<128x64xf32> to vector<128x64xbf16>
    %c0_8 = arith.constant 0 : index
    %c0_9 = arith.constant 0 : index
    %12 = vector.load %arg5[%c0_8, %c0_9] : memref<64x32xbf16, #tpu.memory_space<vmem>>, vector<64x32xbf16>
    %cst_10 = arith.constant dense<0.000000e+00> : vector<128x32xf32>
    %13 = tpu.matmul %11, %12, %cst_10 {dimension_numbers = #tpu.dot_dimension_numbers<[1], [0], [0], [1], [0, 0, 1, 1], [], []>} : vector<128x64xbf16>, vector<64x32xbf16>, vector<128x32xf32> -> vector<128x32xf32>
    %c0_11 = arith.constant 0 : index
    %c0_12 = arith.constant 0 : index
    %14 = vector.load %arg6[%c0_11, %c0_12] : memref<1x32xf32, #tpu.memory_space<vmem>>, vector<1x32xf32>
    %15 = vector.broadcast %14 : vector<1x32xf32> to vector<128x32xf32>
    %16 = arith.mulf %13, %15 : vector<128x32xf32>
    %c0_13 = arith.constant 0 : index
    %c0_14 = arith.constant 0 : index
    %17 = vector.load %arg7[%c0_13, %c0_14] : memref<1x32xf32, #tpu.memory_space<vmem>>, vector<1x32xf32>
    %18 = vector.broadcast %17 : vector<1x32xf32> to vector<128x32xf32>
    %19 = arith.addf %16, %18 : vector<128x32xf32>
    %cst_15 = arith.constant 0.000000e+00 : f32
    %20 = vector.broadcast %cst_15 : f32 to vector<128x32xf32>
    %21 = arith.maximumf %19, %20 : vector<128x32xf32>
    %c0_16 = arith.constant 0 : index
    %c0_17 = arith.constant 0 : index
    %22 = vector.load %arg8[%c0_16, %c0_17] : memref<1x32xf32, #tpu.memory_space<vmem>>, vector<1x32xf32>
    %23 = vector.broadcast %22 : vector<1x32xf32> to vector<128x32xf32>
    %24 = arith.mulf %21, %23 : vector<128x32xf32>
    %cst_18 = arith.constant dense<0.000000e+00> : vector<128xf32>
    %25 = vector.multi_reduction <add>, %24, %cst_18 [1] : vector<128x32xf32> to vector<128xf32>
    %26 = vector.shape_cast %25 : vector<128xf32> to vector<1x128xf32>
    %c0_19 = arith.constant 0 : index
    %c0_20 = arith.constant 0 : index
    %27 = vector.load %arg9[%c0_19, %c0_20] : memref<1x128xf32, #tpu.memory_space<vmem>>, vector<1x128xf32>
    tpu.vector_store %arg9[%c0_19, %c0_20], %26 {strides = array<i32>} : memref<1x128xf32, #tpu.memory_space<vmem>>, vector<1x128xf32>,
    return
  }
  func.func @transform_0(%arg0: i32) -> (i32, i32) {
    %c0_i32 = arith.constant 0 : i32
    %c0_i32_0 = arith.constant 0 : i32
    return %arg0, %c0_i32 : i32, i32
  }
  func.func @transform_1(%arg0: i32) -> (i32, i32) {
    %c0_i32 = arith.constant 0 : i32
    %c0_i32_0 = arith.constant 0 : i32
    %c0_i32_1 = arith.constant 0 : i32
    return %c0_i32, %c0_i32_0 : i32, i32
  }
  func.func @transform_2(%arg0: i32) -> (i32, i32) {
    %c0_i32 = arith.constant 0 : i32
    %c0_i32_0 = arith.constant 0 : i32
    %c0_i32_1 = arith.constant 0 : i32
    return %c0_i32, %c0_i32_0 : i32, i32
  }
  func.func @transform_3(%arg0: i32) -> (i32, i32) {
    %c0_i32 = arith.constant 0 : i32
    %c0_i32_0 = arith.constant 0 : i32
    %c0_i32_1 = arith.constant 0 : i32
    return %c0_i32, %c0_i32_0 : i32, i32
  }
  func.func @transform_4(%arg0: i32) -> (i32, i32) {
    %c0_i32 = arith.constant 0 : i32
    %c0_i32_0 = arith.constant 0 : i32
    %c0_i32_1 = arith.constant 0 : i32
    return %c0_i32, %c0_i32_0 : i32, i32
  }
  func.func @transform_5(%arg0: i32) -> (i32, i32) {
    %c0_i32 = arith.constant 0 : i32
    %c0_i32_0 = arith.constant 0 : i32
    %c0_i32_1 = arith.constant 0 : i32
    return %c0_i32, %c0_i32_0 : i32, i32
  }
  func.func @transform_6(%arg0: i32) -> (i32, i32) {
    %c0_i32 = arith.constant 0 : i32
    %c0_i32_0 = arith.constant 0 : i32
    %c0_i32_1 = arith.constant 0 : i32
    return %c0_i32, %c0_i32_0 : i32, i32
  }
  func.func @transform_7(%arg0: i32) -> (i32, i32) {
    %c0_i32 = arith.constant 0 : i32
    %c0_i32_0 = arith.constant 0 : i32
    %c0_i32_1 = arith.constant 0 : i32
    return %c0_i32, %c0_i32_0 : i32, i32
  }
  func.func @transform_8(%arg0: i32) -> (i32, i32) {
    %c0_i32 = arith.constant 0 : i32
    %c0_i32_0 = arith.constant 0 : i32
    return %arg0, %c0_i32 : i32, i32
  }
}

</mosaic_0001>

<llo_original>
// kernel: decoder_forward.3
$region0: #{decoder_forward.3}
  #allocation0 [shape = 'u32[]', space=smem, size = 0x4, offset = 0x4, fixed_abs, tag = 'smem constant byte address 0x4 - core index']
  #allocation1 [shape = 'u32[144,128]{1,0:T(1,128)}', space=vmem, size = 0x12000, scoped, tag = 'internal scratch']
  %s0 = inlined_call_operand.vmem [shape: bf16[128,128], index: 0, kind: input, shape index: {}]
  %s1 = inlined_call_operand.vmem [shape: bf16[128,64], index: 1, kind: input, shape index: {}]
  %s2 = inlined_call_operand.vmem [shape: f32[1,64], index: 2, kind: output, shape index: {0}]
  %s3 = inlined_call_operand.vmem [shape: f32[1,64], index: 3, kind: output, shape index: {1}]
  %4 = xla_tuple %s2, %s3
  %s5 = sld [smem:[#allocation0]]
  $region30: #{decoder_forward.3} parent=0
    _
  %s7 = ssub.s32 1, %s5
  %s8 = scalar_select 0, %s7, %s5
  // Predicated region
  $region2: #{decoder_forward.3} parent=0 // pred_check
    _
  $region3: #{decoder_forward.3} parent=0 // pred_check_branch
    %10 = sbr.rel (0) target = $region5
  $region4: #{decoder_forward.3} parent=0 // pred_region
    _
  $region5: #{decoder_forward.3} parent=0 // pred_fallthru
    _
  // Predicated region
  $region6: #{decoder_forward.3} parent=0 // pred_check
    _
  $region7: #{decoder_forward.3} parent=0 // pred_check_branch
    %12 = sbr.rel (0) target = $region9
  $region8: #{decoder_forward.3} parent=0 // pred_region
    _
  $region9: #{decoder_forward.3} parent=0 // pred_fallthru
    _
  %p14 = scmp.eq.s32.totalorder 0, 0
  // Predicated region
  $region10: #{decoder_forward.3} parent=0 // pred_check
    %p15 = pneg %p14
  $region11: #{decoder_forward.3} parent=0 // pred_check_branch
    %17 = sbr.rel (%p15) target = $region13
  $region12: #{decoder_forward.3} parent=0 // pred_region
    %vm18 = vcmask 516096
    %19 = vst.msk [vmem:[%s2] sm:$0x1] %vm18, 0.0
    %20 = vst.msk [vmem:[%s3] sm:$0x1] %vm18, 0.0
  $region13: #{decoder_forward.3} parent=0 // pred_fallthru
    _
  %v21 = vld [vmem:[%s0] sm:$0xf]
  %v22 = vld [vmem:[%s0 + $0x4] sm:$0xf]
  %v23 = vld [vmem:[%s0 + $0x8] sm:$0xf]
  %v24 = vld [vmem:[%s0 + $0xc] sm:$0xf]
  %v25 = vld [vmem:[%s0 + $0x10] sm:$0xf]
  %v26 = vld [vmem:[%s0 + $0x14] sm:$0xf]
  %v27 = vld [vmem:[%s0 + $0x18] sm:$0xf]
  %v28 = vld [vmem:[%s0 + $0x1c] sm:$0xf]
  %v29 = vld [vmem:[%s0 + $0x20] sm:$0xf]
  %v30 = vld [vmem:[%s0 + $0x24] sm:$0xf]
  %v31 = vld [vmem:[%s0 + $0x28] sm:$0xf]
  %v32 = vld [vmem:[%s0 + $0x2c] sm:$0xf]
  %v33 = vld [vmem:[%s0 + $0x30] sm:$0xf]
  %v34 = vld [vmem:[%s0 + $0x34] sm:$0xf]
  %v35 = vld [vmem:[%s0 + $0x38] sm:$0xf]
  %v36 = vld [vmem:[%s0 + $0x3c] sm:$0xf]
  %v37 = vld [vmem:[%s1] sm:$0xf]
  %v38 = vld [vmem:[%s1 + $0x4] sm:$0xf]
  %v39 = vld [vmem:[%s1 + $0x8] sm:$0xf]
  %v40 = vld [vmem:[%s1 + $0xc] sm:$0xf]
  %v41 = vld [vmem:[%s1 + $0x10] sm:$0xf]
  %v42 = vld [vmem:[%s1 + $0x14] sm:$0xf]
  %v43 = vld [vmem:[%s1 + $0x18] sm:$0xf]
  %v44 = vld [vmem:[%s1 + $0x1c] sm:$0xf]
  %v45 = vld [vmem:[%s1 + $0x20] sm:$0xf]
  %v46 = vld [vmem:[%s1 + $0x24] sm:$0xf]
  %v47 = vld [vmem:[%s1 + $0x28] sm:$0xf]
  %v48 = vld [vmem:[%s1 + $0x2c] sm:$0xf]
  %v49 = vld [vmem:[%s1 + $0x30] sm:$0xf]
  %v50 = vld [vmem:[%s1 + $0x34] sm:$0xf]
  %v51 = vld [vmem:[%s1 + $0x38] sm:$0xf]
  %v52 = vld [vmem:[%s1 + $0x3c] sm:$0xf]
  %v69 = vunpack.c.l.b16 %v21
  %v70 = vunpack.c.l.b16 %v22
  %v71 = vunpack.c.l.b16 %v23
  %v72 = vunpack.c.l.b16 %v24
  %v73 = vunpack.c.l.b16 %v25
  %v74 = vunpack.c.l.b16 %v26
  %v75 = vunpack.c.l.b16 %v27
  %v76 = vunpack.c.l.b16 %v28
  %v77 = vunpack.c.l.b16 %v29
  %v78 = vunpack.c.l.b16 %v30
  %v79 = vunpack.c.l.b16 %v31
  %v80 = vunpack.c.l.b16 %v32
  %v81 = vunpack.c.l.b16 %v33
  %v82 = vunpack.c.l.b16 %v34
  %v83 = vunpack.c.l.b16 %v35
  %v84 = vunpack.c.l.b16 %v36
  %v85 = vpack.c.b16 %v70, %v69
  %v86 = vpack.c.b16 %v72, %v71
  %v87 = vpack.c.b16 %v74, %v73
  %v88 = vpack.c.b16 %v76, %v75
  %v89 = vpack.c.b16 %v78, %v77
  %v90 = vpack.c.b16 %v80, %v79
  %v91 = vpack.c.b16 %v82, %v81
  %v92 = vpack.c.b16 %v84, %v83
  %v117 = vunpack.c.l.b16 %v37
  %v118 = vunpack.c.l.b16 %v38
  %v119 = vunpack.c.l.b16 %v39
  %v120 = vunpack.c.l.b16 %v40
  %v121 = vunpack.c.l.b16 %v41
  %v122 = vunpack.c.l.b16 %v42
  %v123 = vunpack.c.l.b16 %v43
  %v124 = vunpack.c.l.b16 %v44
  %v125 = vunpack.c.l.b16 %v45
  %v126 = vunpack.c.l.b16 %v46
  %v127 = vunpack.c.l.b16 %v47
  %v128 = vunpack.c.l.b16 %v48
  %v129 = vunpack.c.l.b16 %v49
  %v130 = vunpack.c.l.b16 %v50
  %v131 = vunpack.c.l.b16 %v51
  %v132 = vunpack.c.l.b16 %v52
  %v133 = vpack.c.b16 %v118, %v117
  %v134 = vpack.c.b16 %v120, %v119
  %v135 = vpack.c.b16 %v122, %v121
  %v136 = vpack.c.b16 %v124, %v123
  %v137 = vpack.c.b16 %v126, %v125
  %v138 = vpack.c.b16 %v128, %v127
  %v139 = vpack.c.b16 %v130, %v129
  %v140 = vpack.c.b16 %v132, %v131
  %149 = vmatprep.subr.bf16.mxu0 0
  %150 = vmatpush1.bf16.msra.mxu0 %v133
  %151 = vmatprep.subr.bf16.mxu0 0
  %152 = vmatpush1.bf16.msra.mxu0 %v134
  %153 = vmatprep.subr.bf16.mxu0 0
  %154 = vmatpush1.bf16.msra.mxu0 %v135
  %155 = vmatprep.subr.bf16.mxu0 0
  %156 = vmatpush1.bf16.msra.mxu0 %v136
  %157 = vmatprep.subr.bf16.mxu0 0
  %158 = vmatpush1.bf16.msra.mxu0 %v137
  %159 = vmatprep.subr.bf16.mxu0 0
  %160 = vmatpush1.bf16.msra.mxu0 %v138
  %161 = vmatprep.subr.bf16.mxu0 0
  %162 = vmatpush1.bf16.msra.mxu0 %v139
  %163 = vmatprep.subr.bf16.mxu0 0
  %164 = vmatpush1.bf16.msra.mxu0 %v140
  %165 = vmatprep.subr.bf16.mxu0 0
  %166 = vmatpush1.bf16.msra.mxu0 0
  %167 = vmatprep.subr.bf16.mxu0 0
  %168 = vmatpush1.bf16.msra.mxu0 0
  %169 = vmatprep.subr.bf16.mxu0 0
  %170 = vmatpush1.bf16.msra.mxu0 0
  %171 = vmatprep.subr.bf16.mxu0 0
  %172 = vmatpush1.bf16.msra.mxu0 0
  %173 = vmatprep.subr.bf16.mxu0 0
  %174 = vmatpush1.bf16.msra.mxu0 0
  %175 = vmatprep.subr.bf16.mxu0 0
  %176 = vmatpush1.bf16.msra.mxu0 0
  %177 = vmatprep.subr.bf16.mxu0 0
  %178 = vmatpush1.bf16.msra.mxu0 0
  %179 = vmatprep.subr.bf16.mxu0 0
  %180 = vmatpush1.bf16.msra.mxu0 0
  %181 = vmatprep.mubr.bf16.mxu0 0
  %182 = vmatmul.mubr.bf16.gmra.mrb[0].mxu0 %v85
  %v183 = vpop.f32.mrb[0].mxu0
  %v184 = vadd.f32 0.0, %v183
  %v185 = vpop.f32.mrb[0].mxu0
  %v186 = vpop.f32.mrb[0].mxu0
  %v187 = vadd.f32 0.0, %v186
  %v188 = vpop.f32.mrb[0].mxu0
  %189 = vmatprep.mubr.bf16.mxu0 0
  %190 = vmatmul.mubr.bf16.gmra.mrb[0].mxu0 %v86
  %v191 = vpop.f32.mrb[0].mxu0
  %v192 = vadd.f32 0.0, %v191
  %v193 = vpop.f32.mrb[0].mxu0
  %v194 = vpop.f32.mrb[0].mxu0
  %v195 = vadd.f32 0.0, %v194
  %v196 = vpop.f32.mrb[0].mxu0
  %197 = vmatprep.mubr.bf16.mxu0 0
  %198 = vmatmul.mubr.bf16.gmra.mrb[0].mxu0 %v87
  %v199 = vpop.f32.mrb[0].mxu0
  %v200 = vadd.f32 0.0, %v199
  %v201 = vpop.f32.mrb[0].mxu0
  %v202 = vpop.f32.mrb[0].mxu0
  %v203 = vadd.f32 0.0, %v202
  %v204 = vpop.f32.mrb[0].mxu0
  %205 = vmatprep.mubr.bf16.mxu0 0
  %206 = vmatmul.mubr.bf16.gmra.mrb[0].mxu0 %v88
  %v207 = vpop.f32.mrb[0].mxu0
  %v208 = vadd.f32 0.0, %v207
  %v209 = vpop.f32.mrb[0].mxu0
  %v210 = vpop.f32.mrb[0].mxu0
  %v211 = vadd.f32 0.0, %v210
  %v212 = vpop.f32.mrb[0].mxu0
  %213 = vmatprep.mubr.bf16.mxu0 0
  %214 = vmatmul.mubr.bf16.gmra.mrb[0].mxu0 %v89
  %v215 = vpop.f32.mrb[0].mxu0
  %v216 = vadd.f32 0.0, %v215
  %v217 = vpop.f32.mrb[0].mxu0
  %v218 = vpop.f32.mrb[0].mxu0
  %v219 = vadd.f32 0.0, %v218
  %v220 = vpop.f32.mrb[0].mxu0
  %221 = vmatprep.mubr.bf16.mxu0 0
  %222 = vmatmul.mubr.bf16.gmra.mrb[0].mxu0 %v90
  %v223 = vpop.f32.mrb[0].mxu0
  %v224 = vadd.f32 0.0, %v223
  %v225 = vpop.f32.mrb[0].mxu0
  %v226 = vpop.f32.mrb[0].mxu0
  %v227 = vadd.f32 0.0, %v226
  %v228 = vpop.f32.mrb[0].mxu0
  %229 = vmatprep.mubr.bf16.mxu0 0
  %230 = vmatmul.mubr.bf16.gmra.mrb[0].mxu0 %v91
  %v231 = vpop.f32.mrb[0].mxu0
  %v232 = vadd.f32 0.0, %v231
  %v233 = vpop.f32.mrb[0].mxu0
  %v234 = vpop.f32.mrb[0].mxu0
  %v235 = vadd.f32 0.0, %v234
  %v236 = vpop.f32.mrb[0].mxu0
  %237 = vmatprep.mubr.bf16.mxu0 0
  %238 = vmatmul.mubr.bf16.gmra.mrb[0].mxu0 %v92
  %v239 = vpop.f32.mrb[0].mxu0
  %v240 = vadd.f32 0.0, %v239
  %v241 = vpop.f32.mrb[0].mxu0
  %v242 = vpop.f32.mrb[0].mxu0
  %v243 = vadd.f32 0.0, %v242
  %v244 = vpop.f32.mrb[0].mxu0
  %245 = vdwg.mxu0
  %v246 = vld [vmem:[%s2] sm:$0x1]
  %vm247 = vcmask 523264
  %v248 = vsel %vm247, %v184, 0.0
  %v249 = vsel %vm247, %v187, 0.0
  %v250 = vadd.f32 %v248, %v249
  %v251 = vsel %vm247, %v192, 0.0
  %v252 = vadd.f32 %v250, %v251
  %v253 = vsel %vm247, %v195, 0.0
  %v254 = vadd.f32 %v252, %v253
  %v255 = vsel %vm247, %v200, 0.0
  %v256 = vadd.f32 %v254, %v255
  %v257 = vsel %vm247, %v203, 0.0
  %v258 = vadd.f32 %v256, %v257
  %v259 = vsel %vm247, %v208, 0.0
  %v260 = vadd.f32 %v258, %v259
  %v261 = vsel %vm247, %v211, 0.0
  %v262 = vadd.f32 %v260, %v261
  %v263 = vsel %vm247, %v216, 0.0
  %v264 = vadd.f32 %v262, %v263
  %v265 = vsel %vm247, %v219, 0.0
  %v266 = vadd.f32 %v264, %v265
  %v267 = vsel %vm247, %v224, 0.0
  %v268 = vadd.f32 %v266, %v267
  %v269 = vsel %vm247, %v227, 0.0
  %v270 = vadd.f32 %v268, %v269
  %v271 = vsel %vm247, %v232, 0.0
  %v272 = vadd.f32 %v270, %v271
  %v273 = vsel %vm247, %v235, 0.0
  %v274 = vadd.f32 %v272, %v273
  %v275 = vsel %vm247, %v240, 0.0
  %v276 = vadd.f32 %v274, %v275
  %v277 = vsel %vm247, %v243, 0.0
  %v278 = vadd.f32 %v276, %v277
  %v279 = vrot.slane %v278, 4
  %v280 = vadd.f32 %v278, %v279
  %v281 = vrot.slane %v280, 2
  %v282 = vadd.f32 %v280, %v281
  %v283 = vrot.slane %v282, 1
  %v284 = vadd.f32 %v282, %v283
  %v285 = vadd.f32 %v246, %v284
  %vm286 = vcmask 516096
  %287 = vst.msk [vmem:[%s2] sm:$0x1] %vm286, %v285
  %v288 = vld [vmem:[%s3] sm:$0x1]
  %v289 = vmul.f32 %v184, %v184
  %v290 = vmul.f32 %v187, %v187
  %v291 = vmul.f32 %v192, %v192
  %v292 = vmul.f32 %v195, %v195
  %v293 = vmul.f32 %v200, %v200
  %v294 = vmul.f32 %v203, %v203
  %v295 = vmul.f32 %v208, %v208
  %v296 = vmul.f32 %v211, %v211
  %v297 = vmul.f32 %v216, %v216
  %v298 = vmul.f32 %v219, %v219
  %v299 = vmul.f32 %v224, %v224
  %v300 = vmul.f32 %v227, %v227
  %v301 = vmul.f32 %v232, %v232
  %v302 = vmul.f32 %v235, %v235
  %v303 = vmul.f32 %v240, %v240
  %v304 = vmul.f32 %v243, %v243
  %v305 = vsel %vm247, %v289, 0.0
  %v306 = vsel %vm247, %v290, 0.0
  %v307 = vadd.f32 %v305, %v306
  %v308 = vsel %vm247, %v291, 0.0
  %v309 = vadd.f32 %v307, %v308
  %v310 = vsel %vm247, %v292, 0.0
  %v311 = vadd.f32 %v309, %v310
  %v312 = vsel %vm247, %v293, 0.0
  %v313 = vadd.f32 %v311, %v312
  %v314 = vsel %vm247, %v294, 0.0
  %v315 = vadd.f32 %v313, %v314
  %v316 = vsel %vm247, %v295, 0.0
  %v317 = vadd.f32 %v315, %v316
  %v318 = vsel %vm247, %v296, 0.0
  %v319 = vadd.f32 %v317, %v318
  %v320 = vsel %vm247, %v297, 0.0
  %v321 = vadd.f32 %v319, %v320
  %v322 = vsel %vm247, %v298, 0.0
  %v323 = vadd.f32 %v321, %v322
  %v324 = vsel %vm247, %v299, 0.0
  %v325 = vadd.f32 %v323, %v324
  %v326 = vsel %vm247, %v300, 0.0
  %v327 = vadd.f32 %v325, %v326
  %v328 = vsel %vm247, %v301, 0.0
  %v329 = vadd.f32 %v327, %v328
  %v330 = vsel %vm247, %v302, 0.0
  %v331 = vadd.f32 %v329, %v330
  %v332 = vsel %vm247, %v303, 0.0
  %v333 = vadd.f32 %v331, %v332
  %v334 = vsel %vm247, %v304, 0.0
  %v335 = vadd.f32 %v333, %v334
  %v336 = vrot.slane %v335, 4
  %v337 = vadd.f32 %v335, %v336
  %v338 = vrot.slane %v337, 2
  %v339 = vadd.f32 %v337, %v338
  %v340 = vrot.slane %v339, 1
  %v341 = vadd.f32 %v339, %v340
  %v342 = vadd.f32 %v288, %v341
  %343 = vst.msk [vmem:[%s3] sm:$0x1] %vm286, %v342
  // Predicated region
  $region14: #{decoder_forward.3} parent=0 // pred_check
    _
  $region15: #{decoder_forward.3} parent=0 // pred_check_branch
    %345 = sbr.rel (0) target = $region17
  $region16: #{decoder_forward.3} parent=0 // pred_region
    _
  $region17: #{decoder_forward.3} parent=0 // pred_fallthru
    _
  // Predicated region
  $region18: #{decoder_forward.3} parent=0 // pred_check
    _
  $region19: #{decoder_forward.3} parent=0 // pred_check_branch
    %347 = sbr.rel (0) target = $region21
  $region20: #{decoder_forward.3} parent=0 // pred_region
    _
  $region21: #{decoder_forward.3} parent=0 // pred_fallthru
    _
  // Predicated region
  $region22: #{decoder_forward.3} parent=0 // pred_check
    _
  $region23: #{decoder_forward.3} parent=0 // pred_check_branch
    %349 = sbr.rel (0) target = $region25
  $region24: #{decoder_forward.3} parent=0 // pred_region
    _
  $region25: #{decoder_forward.3} parent=0 // pred_fallthru
    _
  // Predicated region
  $region26: #{decoder_forward.3} parent=0 // pred_check
    _
  $region27: #{decoder_forward.3} parent=0 // pred_check_branch
    %351 = sbr.rel (0) target = $region29
  $region28: #{decoder_forward.3} parent=0 // pred_region
    _
  $region29: #{decoder_forward.3} parent=0 // pred_fallthru
    _

// kernel: decoder_forward.4
$region0: #{decoder_forward.4}
  #allocation0 [shape = 'u32[]', space=smem, size = 0x4, offset = 0x4, fixed_abs, tag = 'smem constant byte address 0x4 - core index']
  #allocation1 [shape = 'u32[144,128]{1,0:T(1,128)}', space=vmem, size = 0x12000, scoped, tag = 'internal scratch']
  %s0 = inlined_call_operand.vmem [shape: bf16[128,128], index: 0, kind: input, shape index: {}]
  %s1 = inlined_call_operand.vmem [shape: bf16[128,64], index: 1, kind: input, shape index: {}]
  %s2 = inlined_call_operand.vmem [shape: f32[1,64], index: 2, kind: input, shape index: {}]
  %s3 = inlined_call_operand.vmem [shape: f32[1,64], index: 3, kind: input, shape index: {}]
  %s4 = inlined_call_operand.vmem [shape: bf16[64,32], index: 4, kind: input, shape index: {}]
  %s5 = inlined_call_operand.vmem [shape: f32[1,32], index: 5, kind: output, shape index: {0}]
  %s6 = inlined_call_operand.vmem [shape: f32[1,32], index: 6, kind: output, shape index: {1}]
  %7 = xla_tuple %s5, %s6
  %s8 = sld [smem:[#allocation0]]
  $region42: #{decoder_forward.4} parent=0
    _
  %s10 = ssub.s32 1, %s8
  %s11 = scalar_select 0, %s10, %s8
  // Predicated region
  $region2: #{decoder_forward.4} parent=0 // pred_check
    _
  $region3: #{decoder_forward.4} parent=0 // pred_check_branch
    %13 = sbr.rel (0) target = $region5
  $region4: #{decoder_forward.4} parent=0 // pred_region
    _
  $region5: #{decoder_forward.4} parent=0 // pred_fallthru
    _
  // Predicated region
  $region6: #{decoder_forward.4} parent=0 // pred_check
    _
  $region7: #{decoder_forward.4} parent=0 // pred_check_branch
    %15 = sbr.rel (0) target = $region9
  $region8: #{decoder_forward.4} parent=0 // pred_region
    _
  $region9: #{decoder_forward.4} parent=0 // pred_fallthru
    _
  // Predicated region
  $region10: #{decoder_forward.4} parent=0 // pred_check
    _
  $region11: #{decoder_forward.4} parent=0 // pred_check_branch
    %17 = sbr.rel (0) target = $region13
  $region12: #{decoder_forward.4} parent=0 // pred_region
    _
  $region13: #{decoder_forward.4} parent=0 // pred_fallthru
    _
  // Predicated region
  $region14: #{decoder_forward.4} parent=0 // pred_check
    _
  $region15: #{decoder_forward.4} parent=0 // pred_check_branch
    %19 = sbr.rel (0) target = $region17
  $region16: #{decoder_forward.4} parent=0 // pred_region
    _
  $region17: #{decoder_forward.4} parent=0 // pred_fallthru
    _
  // Predicated region
  $region18: #{decoder_forward.4} parent=0 // pred_check
    _
  $region19: #{decoder_forward.4} parent=0 // pred_check_branch
    %21 = sbr.rel (0) target = $region21
  $region20: #{decoder_forward.4} parent=0 // pred_region
    _
  $region21: #{decoder_forward.4} parent=0 // pred_fallthru
    _
  %p23 = scmp.eq.s32.totalorder 0, 0
  // Predicated region
  $region22: #{decoder_forward.4} parent=0 // pred_check
    %p24 = pneg %p23
  $region23: #{decoder_forward.4} parent=0 // pred_check_branch
    %26 = sbr.rel (%p24) target = $region25
  $region24: #{decoder_forward.4} parent=0 // pred_region
    %vm27 = vcmask 253952
    %28 = vst.msk [vmem:[%s5] sm:$0x1] %vm27, 0.0
    %29 = vst.msk [vmem:[%s6] sm:$0x1] %vm27, 0.0
  $region25: #{decoder_forward.4} parent=0 // pred_fallthru
    _
  %v30 = vld [vmem:[%s0] sm:$0xf]
  %v31 = vld [vmem:[%s0 + $0x4] sm:$0xf]
  %v32 = vld [vmem:[%s0 + $0x8] sm:$0xf]
  %v33 = vld [vmem:[%s0 + $0xc] sm:$0xf]
  %v34 = vld [vmem:[%s0 + $0x10] sm:$0xf]
  %v35 = vld [vmem:[%s0 + $0x14] sm:$0xf]
  %v36 = vld [vmem:[%s0 + $0x18] sm:$0xf]
  %v37 = vld [vmem:[%s0 + $0x1c] sm:$0xf]
  %v38 = vld [vmem:[%s0 + $0x20] sm:$0xf]
  %v39 = vld [vmem:[%s0 + $0x24] sm:$0xf]
  %v40 = vld [vmem:[%s0 + $0x28] sm:$0xf]
  %v41 = vld [vmem:[%s0 + $0x2c] sm:$0xf]
  %v42 = vld [vmem:[%s0 + $0x30] sm:$0xf]
  %v43 = vld [vmem:[%s0 + $0x34] sm:$0xf]
  %v44 = vld [vmem:[%s0 + $0x38] sm:$0xf]
  %v45 = vld [vmem:[%s0 + $0x3c] sm:$0xf]
  %v46 = vld [vmem:[%s1] sm:$0xf]
  %v47 = vld [vmem:[%s1 + $0x4] sm:$0xf]
  %v48 = vld [vmem:[%s1 + $0x8] sm:$0xf]
  %v49 = vld [vmem:[%s1 + $0xc] sm:$0xf]
  %v50 = vld [vmem:[%s1 + $0x10] sm:$0xf]
  %v51 = vld [vmem:[%s1 + $0x14] sm:$0xf]
  %v52 = vld [vmem:[%s1 + $0x18] sm:$0xf]
  %v53 = vld [vmem:[%s1 + $0x1c] sm:$0xf]
  %v54 = vld [vmem:[%s1 + $0x20] sm:$0xf]
  %v55 = vld [vmem:[%s1 + $0x24] sm:$0xf]
  %v56 = vld [vmem:[%s1 + $0x28] sm:$0xf]
  %v57 = vld [vmem:[%s1 + $0x2c] sm:$0xf]
  %v58 = vld [vmem:[%s1 + $0x30] sm:$0xf]
  %v59 = vld [vmem:[%s1 + $0x34] sm:$0xf]
  %v60 = vld [vmem:[%s1 + $0x38] sm:$0xf]
  %v61 = vld [vmem:[%s1 + $0x3c] sm:$0xf]
  %v78 = vunpack.c.l.b16 %v30
  %v79 = vunpack.c.l.b16 %v31
  %v80 = vunpack.c.l.b16 %v32
  %v81 = vunpack.c.l.b16 %v33
  %v82 = vunpack.c.l.b16 %v34
  %v83 = vunpack.c.l.b16 %v35
  %v84 = vunpack.c.l.b16 %v36
  %v85 = vunpack.c.l.b16 %v37
  %v86 = vunpack.c.l.b16 %v38
  %v87 = vunpack.c.l.b16 %v39
  %v88 = vunpack.c.l.b16 %v40
  %v89 = vunpack.c.l.b16 %v41
  %v90 = vunpack.c.l.b16 %v42
  %v91 = vunpack.c.l.b16 %v43
  %v92 = vunpack.c.l.b16 %v44
  %v93 = vunpack.c.l.b16 %v45
  %v94 = vpack.c.b16 %v79, %v78
  %v95 = vpack.c.b16 %v81, %v80
  %v96 = vpack.c.b16 %v83, %v82
  %v97 = vpack.c.b16 %v85, %v84
  %v98 = vpack.c.b16 %v87, %v86
  %v99 = vpack.c.b16 %v89, %v88
  %v100 = vpack.c.b16 %v91, %v90
  %v101 = vpack.c.b16 %v93, %v92
  %v126 = vunpack.c.l.b16 %v46
  %v127 = vunpack.c.l.b16 %v47
  %v128 = vunpack.c.l.b16 %v48
  %v129 = vunpack.c.l.b16 %v49
  %v130 = vunpack.c.l.b16 %v50
  %v131 = vunpack.c.l.b16 %v51
  %v132 = vunpack.c.l.b16 %v52
  %v133 = vunpack.c.l.b16 %v53
  %v134 = vunpack.c.l.b16 %v54
  %v135 = vunpack.c.l.b16 %v55
  %v136 = vunpack.c.l.b16 %v56
  %v137 = vunpack.c.l.b16 %v57
  %v138 = vunpack.c.l.b16 %v58
  %v139 = vunpack.c.l.b16 %v59
  %v140 = vunpack.c.l.b16 %v60
  %v141 = vunpack.c.l.b16 %v61
  %v142 = vpack.c.b16 %v127, %v126
  %v143 = vpack.c.b16 %v129, %v128
  %v144 = vpack.c.b16 %v131, %v130
  %v145 = vpack.c.b16 %v133, %v132
  %v146 = vpack.c.b16 %v135, %v134
  %v147 = vpack.c.b16 %v137, %v136
  %v148 = vpack.c.b16 %v139, %v138
  %v149 = vpack.c.b16 %v141, %v140
  %158 = vmatprep.subr.bf16.mxu0 0
  %159 = vmatpush1.bf16.msra.mxu0 %v142
  %160 = vmatprep.subr.bf16.mxu0 0
  %161 = vmatpush1.bf16.msra.mxu0 %v143
  %162 = vmatprep.subr.bf16.mxu0 0
  %163 = vmatpush1.bf16.msra.mxu0 %v144
  %164 = vmatprep.subr.bf16.mxu0 0
  %165 = vmatpush1.bf16.msra.mxu0 %v145
  %166 = vmatprep.subr.bf16.mxu0 0
  %167 = vmatpush1.bf16.msra.mxu0 %v146
  %168 = vmatprep.subr.bf16.mxu0 0
  %169 = vmatpush1.bf16.msra.mxu0 %v147
  %170 = vmatprep.subr.bf16.mxu0 0
  %171 = vmatpush1.bf16.msra.mxu0 %v148
  %172 = vmatprep.subr.bf16.mxu0 0
  %173 = vmatpush1.bf16.msra.mxu0 %v149
  %174 = vmatprep.subr.bf16.mxu0 0
  %175 = vmatpush1.bf16.msra.mxu0 0
  %176 = vmatprep.subr.bf16.mxu0 0
  %177 = vmatpush1.bf16.msra.mxu0 0
  %178 = vmatprep.subr.bf16.mxu0 0
  %179 = vmatpush1.bf16.msra.mxu0 0
  %180 = vmatprep.subr.bf16.mxu0 0
  %181 = vmatpush1.bf16.msra.mxu0 0
  %182 = vmatprep.subr.bf16.mxu0 0
  %183 = vmatpush1.bf16.msra.mxu0 0
  %184 = vmatprep.subr.bf16.mxu0 0
  %185 = vmatpush1.bf16.msra.mxu0 0
  %186 = vmatprep.subr.bf16.mxu0 0
  %187 = vmatpush1.bf16.msra.mxu0 0
  %188 = vmatprep.subr.bf16.mxu0 0
  %189 = vmatpush1.bf16.msra.mxu0 0
  %190 = vmatprep.mubr.bf16.mxu0 0
  %191 = vmatmul.mubr.bf16.gmra.mrb[0].mxu0 %v94
  %v192 = vpop.f32.mrb[0].mxu0
  %v193 = vadd.f32 0.0, %v192
  %v194 = vpop.f32.mrb[0].mxu0
  %v195 = vpop.f32.mrb[0].mxu0
  %v196 = vadd.f32 0.0, %v195
  %v197 = vpop.f32.mrb[0].mxu0
  %198 = vmatprep.mubr.bf16.mxu0 0
  %199 = vmatmul.mubr.bf16.gmra.mrb[0].mxu0 %v95
  %v200 = vpop.f32.mrb[0].mxu0
  %v201 = vadd.f32 0.0, %v200
  %v202 = vpop.f32.mrb[0].mxu0
  %v203 = vpop.f32.mrb[0].mxu0
  %v204 = vadd.f32 0.0, %v203
  %v205 = vpop.f32.mrb[0].mxu0
  %206 = vmatprep.mubr.bf16.mxu0 0
  %207 = vmatmul.mubr.bf16.gmra.mrb[0].mxu0 %v96
  %v208 = vpop.f32.mrb[0].mxu0
  %v209 = vadd.f32 0.0, %v208
  %v210 = vpop.f32.mrb[0].mxu0
  %v211 = vpop.f32.mrb[0].mxu0
  %v212 = vadd.f32 0.0, %v211
  %v213 = vpop.f32.mrb[0].mxu0
  %214 = vmatprep.mubr.bf16.mxu0 0
  %215 = vmatmul.mubr.bf16.gmra.mrb[0].mxu0 %v97
  %v216 = vpop.f32.mrb[0].mxu0
  %v217 = vadd.f32 0.0, %v216
  %v218 = vpop.f32.mrb[0].mxu0
  %v219 = vpop.f32.mrb[0].mxu0
  %v220 = vadd.f32 0.0, %v219
  %v221 = vpop.f32.mrb[0].mxu0
  %222 = vmatprep.mubr.bf16.mxu0 0
  %223 = vmatmul.mubr.bf16.gmra.mrb[0].mxu0 %v98
  %v224 = vpop.f32.mrb[0].mxu0
  %v225 = vadd.f32 0.0, %v224
  %v226 = vpop.f32.mrb[0].mxu0
  %v227 = vpop.f32.mrb[0].mxu0
  %v228 = vadd.f32 0.0, %v227
  %v229 = vpop.f32.mrb[0].mxu0
  %230 = vmatprep.mubr.bf16.mxu0 0
  %231 = vmatmul.mubr.bf16.gmra.mrb[0].mxu0 %v99
  %v232 = vpop.f32.mrb[0].mxu0
  %v233 = vadd.f32 0.0, %v232
  %v234 = vpop.f32.mrb[0].mxu0
  %v235 = vpop.f32.mrb[0].mxu0
  %v236 = vadd.f32 0.0, %v235
  %v237 = vpop.f32.mrb[0].mxu0
  %238 = vmatprep.mubr.bf16.mxu0 0
  %239 = vmatmul.mubr.bf16.gmra.mrb[0].mxu0 %v100
  %v240 = vpop.f32.mrb[0].mxu0
  %v241 = vadd.f32 0.0, %v240
  %v242 = vpop.f32.mrb[0].mxu0
  %v243 = vpop.f32.mrb[0].mxu0
  %v244 = vadd.f32 0.0, %v243
  %v245 = vpop.f32.mrb[0].mxu0
  %246 = vmatprep.mubr.bf16.mxu0 0
  %247 = vmatmul.mubr.bf16.gmra.mrb[0].mxu0 %v101
  %v248 = vpop.f32.mrb[0].mxu0
  %v249 = vadd.f32 0.0, %v248
  %v250 = vpop.f32.mrb[0].mxu0
  %v251 = vpop.f32.mrb[0].mxu0
  %v252 = vadd.f32 0.0, %v251
  %v253 = vpop.f32.mrb[0].mxu0
  %254 = vdwg.mxu0
  %v255 = vld [vmem:[%s2] sm:$0x1]
  %v257 = vlaneseq
  %v258 = vshrl.u32 %v257, 7
  %v259 = vsub.s32 0, %v258
  %v260 = vrot.slane %v255, %v259
  %v262 = vmul.f32 %v193, %v260
  %v263 = vmul.f32 %v196, %v260
  %v264 = vmul.f32 %v201, %v260
  %v265 = vmul.f32 %v204, %v260
  %v266 = vmul.f32 %v209, %v260
  %v267 = vmul.f32 %v212, %v260
  %v268 = vmul.f32 %v217, %v260
  %v269 = vmul.f32 %v220, %v260
  %v270 = vmul.f32 %v225, %v260
  %v271 = vmul.f32 %v228, %v260
  %v272 = vmul.f32 %v233, %v260
  %v273 = vmul.f32 %v236, %v260
  %v274 = vmul.f32 %v241, %v260
  %v275 = vmul.f32 %v244, %v260
  %v276 = vmul.f32 %v249, %v260
  %v277 = vmul.f32 %v252, %v260
  %v278 = vld [vmem:[%s3] sm:$0x1]
  %v280 = vlaneseq
  %v281 = vshrl.u32 %v280, 7
  %v282 = vsub.s32 0, %v281
  %v283 = vrot.slane %v278, %v282
  %v285 = vadd.f32 %v262, %v283
  %v286 = vadd.f32 %v263, %v283
  %v287 = vadd.f32 %v264, %v283
  %v288 = vadd.f32 %v265, %v283
  %v289 = vadd.f32 %v266, %v283
  %v290 = vadd.f32 %v267, %v283
  %v291 = vadd.f32 %v268, %v283
  %v292 = vadd.f32 %v269, %v283
  %v293 = vadd.f32 %v270, %v283
  %v294 = vadd.f32 %v271, %v283
  %v295 = vadd.f32 %v272, %v283
  %v296 = vadd.f32 %v273, %v283
  %v297 = vadd.f32 %v274, %v283
  %v298 = vadd.f32 %v275, %v283
  %v299 = vadd.f32 %v276, %v283
  %v300 = vadd.f32 %v277, %v283
  %v301 = vmax.f32 %v285, 0.0
  %v302 = vmax.f32 %v286, 0.0
  %v303 = vmax.f32 %v287, 0.0
  %v304 = vmax.f32 %v288, 0.0
  %v305 = vmax.f32 %v289, 0.0
  %v306 = vmax.f32 %v290, 0.0
  %v307 = vmax.f32 %v291, 0.0
  %v308 = vmax.f32 %v292, 0.0
  %v309 = vmax.f32 %v293, 0.0
  %v310 = vmax.f32 %v294, 0.0
  %v311 = vmax.f32 %v295, 0.0
  %v312 = vmax.f32 %v296, 0.0
  %v313 = vmax.f32 %v297, 0.0
  %v314 = vmax.f32 %v298, 0.0
  %v315 = vmax.f32 %v299, 0.0
  %v316 = vmax.f32 %v300, 0.0
  %v317 = vpack.c.bf16 %v302, %v301
  %v318 = vpack.c.bf16 %v304, %v303
  %v319 = vpack.c.bf16 %v306, %v305
  %v320 = vpack.c.bf16 %v308, %v307
  %v321 = vpack.c.bf16 %v310, %v309
  %v322 = vpack.c.bf16 %v312, %v311
  %v323 = vpack.c.bf16 %v314, %v313
  %v324 = vpack.c.bf16 %v316, %v315
  %v325 = vld [vmem:[%s4] sm:$0xf]
  %v326 = vld [vmem:[%s4 + $0x4] sm:$0xf]
  %v327 = vld [vmem:[%s4 + $0x8] sm:$0xf]
  %v328 = vld [vmem:[%s4 + $0xc] sm:$0xf]
  %v329 = vld [vmem:[%s4 + $0x10] sm:$0xf]
  %v330 = vld [vmem:[%s4 + $0x14] sm:$0xf]
  %v331 = vld [vmem:[%s4 + $0x18] sm:$0xf]
  %v332 = vld [vmem:[%s4 + $0x1c] sm:$0xf]
  %v341 = vunpack.c.l.b16 %v325
  %v342 = vunpack.c.l.b16 %v326
  %v343 = vunpack.c.l.b16 %v327
  %v344 = vunpack.c.l.b16 %v328
  %v345 = vunpack.c.l.b16 %v329
  %v346 = vunpack.c.l.b16 %v330
  %v347 = vunpack.c.l.b16 %v331
  %v348 = vunpack.c.l.b16 %v332
  %v349 = vpack.c.b16 %v342, %v341
  %v350 = vpack.c.b16 %v344, %v343
  %v351 = vpack.c.b16 %v346, %v345
  %v352 = vpack.c.b16 %v348, %v347
  %vm357 = vcmask 523264
  %v359 = vsel %vm357, %v317, 0
  %v362 = vsel %vm357, %v318, 0
  %v365 = vsel %vm357, %v319, 0
  %v368 = vsel %vm357, %v320, 0
  %v371 = vsel %vm357, %v321, 0
  %v374 = vsel %vm357, %v322, 0
  %v377 = vsel %vm357, %v323, 0
  %v380 = vsel %vm357, %v324, 0
  %382 = vmatprep.subr.bf16.mxu0 0
  %383 = vmatpush1.bf16.msra.mxu0 %v349
  %384 = vmatprep.subr.bf16.mxu0 0
  %385 = vmatpush1.bf16.msra.mxu0 %v350
  %386 = vmatprep.subr.bf16.mxu0 0
  %387 = vmatpush1.bf16.msra.mxu0 %v351
  %388 = vmatprep.subr.bf16.mxu0 0
  %389 = vmatpush1.bf16.msra.mxu0 %v352
  %390 = vmatprep.subr.bf16.mxu0 0
  %391 = vmatpush1.bf16.msra.mxu0 0
  %392 = vmatprep.subr.bf16.mxu0 0
  %393 = vmatpush1.bf16.msra.mxu0 0
  %394 = vmatprep.subr.bf16.mxu0 0
  %395 = vmatpush1.bf16.msra.mxu0 0
  %396 = vmatprep.subr.bf16.mxu0 0
  %397 = vmatpush1.bf16.msra.mxu0 0
  %398 = vmatprep.subr.bf16.mxu0 0
  %399 = vmatpush1.bf16.msra.mxu0 0
  %400 = vmatprep.subr.bf16.mxu0 0
  %401 = vmatpush1.bf16.msra.mxu0 0
  %402 = vmatprep.subr.bf16.mxu0 0
  %403 = vmatpush1.bf16.msra.mxu0 0
  %404 = vmatprep.subr.bf16.mxu0 0
  %405 = vmatpush1.bf16.msra.mxu0 0
  %406 = vmatprep.subr.bf16.mxu0 0
  %407 = vmatpush1.bf16.msra.mxu0 0
  %408 = vmatprep.subr.bf16.mxu0 0
  %409 = vmatpush1.bf16.msra.mxu0 0
  %410 = vmatprep.subr.bf16.mxu0 0
  %411 = vmatpush1.bf16.msra.mxu0 0
  %412 = vmatprep.subr.bf16.mxu0 0
  %413 = vmatpush1.bf16.msra.mxu0 0
  %414 = vmatprep.mubr.bf16.mxu0 0
  %415 = vmatmul.mubr.bf16.gmra.mrb[0].mxu0 %v359
  %v416 = vpop.f32.mrb[0].mxu0
  %v417 = vadd.f32 0.0, %v416
  %v418 = vpop.f32.mrb[0].mxu0
  %v419 = vpop.f32.mrb[0].mxu0
  %v420 = vadd.f32 0.0, %v419
  %v421 = vpop.f32.mrb[0].mxu0
  %422 = vmatprep.mubr.bf16.mxu0 0
  %423 = vmatmul.mubr.bf16.gmra.mrb[0].mxu0 %v362
  %v424 = vpop.f32.mrb[0].mxu0
  %v425 = vadd.f32 0.0, %v424
  %v426 = vpop.f32.mrb[0].mxu0
  %v427 = vpop.f32.mrb[0].mxu0
  %v428 = vadd.f32 0.0, %v427
  %v429 = vpop.f32.mrb[0].mxu0
  %430 = vmatprep.mubr.bf16.mxu0 0
  %431 = vmatmul.mubr.bf16.gmra.mrb[0].mxu0 %v365
  %v432 = vpop.f32.mrb[0].mxu0
  %v433 = vadd.f32 0.0, %v432
  %v434 = vpop.f32.mrb[0].mxu0
  %v435 = vpop.f32.mrb[0].mxu0
  %v436 = vadd.f32 0.0, %v435
  %v437 = vpop.f32.mrb[0].mxu0
  %438 = vmatprep.mubr.bf16.mxu0 0
  %439 = vmatmul.mubr.bf16.gmra.mrb[0].mxu0 %v368
  %v440 = vpop.f32.mrb[0].mxu0
  %v441 = vadd.f32 0.0, %v440
  %v442 = vpop.f32.mrb[0].mxu0
  %v443 = vpop.f32.mrb[0].mxu0
  %v444 = vadd.f32 0.0, %v443
  %v445 = vpop.f32.mrb[0].mxu0
  %446 = vmatprep.mubr.bf16.mxu0 0
  %447 = vmatmul.mubr.bf16.gmra.mrb[0].mxu0 %v371
  %v448 = vpop.f32.mrb[0].mxu0
  %v449 = vadd.f32 0.0, %v448
  %v450 = vpop.f32.mrb[0].mxu0
  %v451 = vpop.f32.mrb[0].mxu0
  %v452 = vadd.f32 0.0, %v451
  %v453 = vpop.f32.mrb[0].mxu0
  %454 = vmatprep.mubr.bf16.mxu0 0
  %455 = vmatmul.mubr.bf16.gmra.mrb[0].mxu0 %v374
  %v456 = vpop.f32.mrb[0].mxu0
  %v457 = vadd.f32 0.0, %v456
  %v458 = vpop.f32.mrb[0].mxu0
  %v459 = vpop.f32.mrb[0].mxu0
  %v460 = vadd.f32 0.0, %v459
  %v461 = vpop.f32.mrb[0].mxu0
  %462 = vmatprep.mubr.bf16.mxu0 0
  %463 = vmatmul.mubr.bf16.gmra.mrb[0].mxu0 %v377
  %v464 = vpop.f32.mrb[0].mxu0
  %v465 = vadd.f32 0.0, %v464
  %v466 = vpop.f32.mrb[0].mxu0
  %v467 = vpop.f32.mrb[0].mxu0
  %v468 = vadd.f32 0.0, %v467
  %v469 = vpop.f32.mrb[0].mxu0
  %470 = vmatprep.mubr.bf16.mxu0 0
  %471 = vmatmul.mubr.bf16.gmra.mrb[0].mxu0 %v380
  %v472 = vpop.f32.mrb[0].mxu0
  %v473 = vadd.f32 0.0, %v472
  %v474 = vpop.f32.mrb[0].mxu0
  %v475 = vpop.f32.mrb[0].mxu0
  %v476 = vadd.f32 0.0, %v475
  %v477 = vpop.f32.mrb[0].mxu0
  %478 = vdwg.mxu0
  %v479 = vlaneseq
  %v480 = vshrl.u32 %v479, 7
  %v481 = vadd.s32 %v480, 8
  %v482 = vadd.s32 %v480, 16
  %v483 = vadd.s32 %v480, 24
  %v484 = vadd.s32 %v480, 32
  %v485 = vadd.s32 %v480, 40
  %v486 = vadd.s32 %v480, 48
  %v487 = vadd.s32 %v480, 56
  %v488 = vadd.s32 %v480, 64
  %v489 = vadd.s32 %v480, 72
  %v490 = vadd.s32 %v480, 80
  %v491 = vadd.s32 %v480, 88
  %v492 = vadd.s32 %v480, 96
  %v493 = vadd.s32 %v480, 104
  %v494 = vadd.s32 %v480, 112
  %v495 = vadd.s32 %v480, 120
  %s496 = smul.u32 0, 128
  %v497 = vstv %s496
  %v498 = vadd.s32 %v480, %v497
  %v499 = vadd.s32 %v481, %v497
  %v500 = vadd.s32 %v482, %v497
  %v501 = vadd.s32 %v483, %v497
  %v502 = vadd.s32 %v484, %v497
  %v503 = vadd.s32 %v485, %v497
  %v504 = vadd.s32 %v486, %v497
  %v505 = vadd.s32 %v487, %v497
  %v506 = vadd.s32 %v488, %v497
  %v507 = vadd.s32 %v489, %v497
  %v508 = vadd.s32 %v490, %v497
  %v509 = vadd.s32 %v491, %v497
  %v510 = vadd.s32 %v492, %v497
  %v511 = vadd.s32 %v493, %v497
  %v512 = vadd.s32 %v494, %v497
  %v513 = vadd.s32 %v495, %v497
  %vm514 = vcmp.lt.s32.totalorder %v498, 96
  %vm515 = vcmp.lt.s32.totalorder %v499, 96
  %vm516 = vcmp.lt.s32.totalorder %v500, 96
  %vm517 = vcmp.lt.s32.totalorder %v501, 96
  %vm518 = vcmp.lt.s32.totalorder %v502, 96
  %vm519 = vcmp.lt.s32.totalorder %v503, 96
  %vm520 = vcmp.lt.s32.totalorder %v504, 96
  %vm521 = vcmp.lt.s32.totalorder %v505, 96
  %vm522 = vcmp.lt.s32.totalorder %v506, 96
  %vm523 = vcmp.lt.s32.totalorder %v507, 96
  %vm524 = vcmp.lt.s32.totalorder %v508, 96
  %vm525 = vcmp.lt.s32.totalorder %v509, 96
  %vm526 = vcmp.lt.s32.totalorder %v510, 96
  %vm527 = vcmp.lt.s32.totalorder %v511, 96
  %vm528 = vcmp.lt.s32.totalorder %v512, 96
  %vm529 = vcmp.lt.s32.totalorder %v513, 96
  %v530 = vsel %vm514, 1, 0
  %v531 = vsel %vm515, 1, 0
  %v532 = vsel %vm516, 1, 0
  %v533 = vsel %vm517, 1, 0
  %v534 = vsel %vm518, 1, 0
  %v535 = vsel %vm519, 1, 0
  %v536 = vsel %vm520, 1, 0
  %v537 = vsel %vm521, 1, 0
  %v538 = vsel %vm522, 1, 0
  %v539 = vsel %vm523, 1, 0
  %v540 = vsel %vm524, 1, 0
  %v541 = vsel %vm525, 1, 0
  %v542 = vsel %vm526, 1, 0
  %v543 = vsel %vm527, 1, 0
  %v544 = vsel %vm528, 1, 0
  %v545 = vsel %vm529, 1, 0
  %vm546 = vcmp.eq.s32.totalorder %v530, 1
  %vm547 = vcmp.eq.s32.totalorder %v531, 1
  %vm548 = vcmp.eq.s32.totalorder %v532, 1
  %vm549 = vcmp.eq.s32.totalorder %v533, 1
  %vm550 = vcmp.eq.s32.totalorder %v534, 1
  %vm551 = vcmp.eq.s32.totalorder %v535, 1
  %vm552 = vcmp.eq.s32.totalorder %v536, 1
  %vm553 = vcmp.eq.s32.totalorder %v537, 1
  %vm554 = vcmp.eq.s32.totalorder %v538, 1
  %vm555 = vcmp.eq.s32.totalorder %v539, 1
  %vm556 = vcmp.eq.s32.totalorder %v540, 1
  %vm557 = vcmp.eq.s32.totalorder %v541, 1
  %vm558 = vcmp.eq.s32.totalorder %v542, 1
  %vm559 = vcmp.eq.s32.totalorder %v543, 1
  %vm560 = vcmp.eq.s32.totalorder %v544, 1
  %vm561 = vcmp.eq.s32.totalorder %v545, 1
  %v562 = vsel %vm546, %v417, 0.0
  %v563 = vsel %vm547, %v420, 0.0
  %v564 = vsel %vm548, %v425, 0.0
  %v565 = vsel %vm549, %v428, 0.0
  %v566 = vsel %vm550, %v433, 0.0
  %v567 = vsel %vm551, %v436, 0.0
  %v568 = vsel %vm552, %v441, 0.0
  %v569 = vsel %vm553, %v444, 0.0
  %v570 = vsel %vm554, %v449, 0.0
  %v571 = vsel %vm555, %v452, 0.0
  %v572 = vsel %vm556, %v457, 0.0
  %v573 = vsel %vm557, %v460, 0.0
  %v574 = vsel %vm558, %v465, 0.0
  %v575 = vsel %vm559, %v468, 0.0
  %v576 = vsel %vm560, %v473, 0.0
  %v577 = vsel %vm561, %v476, 0.0
  %v578 = vld [vmem:[%s5] sm:$0x1]
  %vm579 = vcmask 261120
  %v580 = vsel %vm579, %v562, 0.0
  %v581 = vsel %vm579, %v563, 0.0
  %v582 = vadd.f32 %v580, %v581
  %v583 = vsel %vm579, %v564, 0.0
  %v584 = vadd.f32 %v582, %v583
  %v585 = vsel %vm579, %v565, 0.0
  %v586 = vadd.f32 %v584, %v585
  %v587 = vsel %vm579, %v566, 0.0
  %v588 = vadd.f32 %v586, %v587
  %v589 = vsel %vm579, %v567, 0.0
  %v590 = vadd.f32 %v588, %v589
  %v591 = vsel %vm579, %v568, 0.0
  %v592 = vadd.f32 %v590, %v591
  %v593 = vsel %vm579, %v569, 0.0
  %v594 = vadd.f32 %v592, %v593
  %v595 = vsel %vm579, %v570, 0.0
  %v596 = vadd.f32 %v594, %v595
  %v597 = vsel %vm579, %v571, 0.0
  %v598 = vadd.f32 %v596, %v597
  %v599 = vsel %vm579, %v572, 0.0
  %v600 = vadd.f32 %v598, %v599
  %v601 = vsel %vm579, %v573, 0.0
  %v602 = vadd.f32 %v600, %v601
  %v603 = vsel %vm579, %v574, 0.0
  %v604 = vadd.f32 %v602, %v603
  %v605 = vsel %vm579, %v575, 0.0
  %v606 = vadd.f32 %v604, %v605
  %v607 = vsel %vm579, %v576, 0.0
  %v608 = vadd.f32 %v606, %v607
  %v609 = vsel %vm579, %v577, 0.0
  %v610 = vadd.f32 %v608, %v609
  %v611 = vrot.slane %v610, 4
  %v612 = vadd.f32 %v610, %v611
  %v613 = vrot.slane %v612, 2
  %v614 = vadd.f32 %v612, %v613
  %v615 = vrot.slane %v614, 1
  %v616 = vadd.f32 %v614, %v615
  %v617 = vadd.f32 %v578, %v616
  %vm618 = vcmask 253952
  %619 = vst.msk [vmem:[%s5] sm:$0x1] %vm618, %v617
  %v620 = vld [vmem:[%s6] sm:$0x1]
  %v621 = vmul.f32 %v562, %v562
  %v622 = vmul.f32 %v563, %v563
  %v623 = vmul.f32 %v564, %v564
  %v624 = vmul.f32 %v565, %v565
  %v625 = vmul.f32 %v566, %v566
  %v626 = vmul.f32 %v567, %v567
  %v627 = vmul.f32 %v568, %v568
  %v628 = vmul.f32 %v569, %v569
  %v629 = vmul.f32 %v570, %v570
  %v630 = vmul.f32 %v571, %v571
  %v631 = vmul.f32 %v572, %v572
  %v632 = vmul.f32 %v573, %v573
  %v633 = vmul.f32 %v574, %v574
  %v634 = vmul.f32 %v575, %v575
  %v635 = vmul.f32 %v576, %v576
  %v636 = vmul.f32 %v577, %v577
  %v637 = vsel %vm579, %v621, 0.0
  %v638 = vsel %vm579, %v622, 0.0
  %v639 = vadd.f32 %v637, %v638
  %v640 = vsel %vm579, %v623, 0.0
  %v641 = vadd.f32 %v639, %v640
  %v642 = vsel %vm579, %v624, 0.0
  %v643 = vadd.f32 %v641, %v642
  %v644 = vsel %vm579, %v625, 0.0
  %v645 = vadd.f32 %v643, %v644
  %v646 = vsel %vm579, %v626, 0.0
  %v647 = vadd.f32 %v645, %v646
  %v648 = vsel %vm579, %v627, 0.0
  %v649 = vadd.f32 %v647, %v648
  %v650 = vsel %vm579, %v628, 0.0
  %v651 = vadd.f32 %v649, %v650
  %v652 = vsel %vm579, %v629, 0.0
  %v653 = vadd.f32 %v651, %v652
  %v654 = vsel %vm579, %v630, 0.0
  %v655 = vadd.f32 %v653, %v654
  %v656 = vsel %vm579, %v631, 0.0
  %v657 = vadd.f32 %v655, %v656
  %v658 = vsel %vm579, %v632, 0.0
  %v659 = vadd.f32 %v657, %v658
  %v660 = vsel %vm579, %v633, 0.0
  %v661 = vadd.f32 %v659, %v660
  %v662 = vsel %vm579, %v634, 0.0
  %v663 = vadd.f32 %v661, %v662
  %v664 = vsel %vm579, %v635, 0.0
  %v665 = vadd.f32 %v663, %v664
  %v666 = vsel %vm579, %v636, 0.0
  %v667 = vadd.f32 %v665, %v666
  %v668 = vrot.slane %v667, 4
  %v669 = vadd.f32 %v667, %v668
  %v670 = vrot.slane %v669, 2
  %v671 = vadd.f32 %v669, %v670
  %v672 = vrot.slane %v671, 1
  %v673 = vadd.f32 %v671, %v672
  %v674 = vadd.f32 %v620, %v673
  %675 = vst.msk [vmem:[%s6] sm:$0x1] %vm618, %v674
  // Predicated region
  $region26: #{decoder_forward.4} parent=0 // pred_check
    _
  $region27: #{decoder_forward.4} parent=0 // pred_check_branch
    %677 = sbr.rel (0) target = $region29
  $region28: #{decoder_forward.4} parent=0 // pred_region
    _
  $region29: #{decoder_forward.4} parent=0 // pred_fallthru
    _
  // Predicated region
  $region30: #{decoder_forward.4} parent=0 // pred_check
    _
  $region31: #{decoder_forward.4} parent=0 // pred_check_branch
    %679 = sbr.rel (0) target = $region33
  $region32: #{decoder_forward.4} parent=0 // pred_region
    _
  $region33: #{decoder_forward.4} parent=0 // pred_fallthru
    _
  // Predicated region
  $region34: #{decoder_forward.4} parent=0 // pred_check
    _
  $region35: #{decoder_forward.4} parent=0 // pred_check_branch
    %681 = sbr.rel (0) target = $region37
  $region36: #{decoder_forward.4} parent=0 // pred_region
    _
  $region37: #{decoder_forward.4} parent=0 // pred_fallthru
    _
  // Predicated region
  $region38: #{decoder_forward.4} parent=0 // pred_check
    _
  $region39: #{decoder_forward.4} parent=0 // pred_check_branch
    %683 = sbr.rel (0) target = $region41
  $region40: #{decoder_forward.4} parent=0 // pred_region
    _
  $region41: #{decoder_forward.4} parent=0 // pred_fallthru
    _

// kernel: decoder_forward.5
$region0: #{decoder_forward.5}
  #allocation0 [shape = 'u32[]', space=smem, size = 0x4, offset = 0x4, fixed_abs, tag = 'smem constant byte address 0x4 - core index']
  #allocation1 [shape = 'u32[144,128]{1,0:T(1,128)}', space=vmem, size = 0x12000, scoped, tag = 'internal scratch']
  %s0 = inlined_call_operand.vmem [shape: bf16[128,128], index: 0, kind: input, shape index: {}]
  %s1 = inlined_call_operand.vmem [shape: bf16[128,64], index: 1, kind: input, shape index: {}]
  %s2 = inlined_call_operand.vmem [shape: f32[1,64], index: 2, kind: input, shape index: {}]
  %s3 = inlined_call_operand.vmem [shape: f32[1,64], index: 3, kind: input, shape index: {}]
  %s4 = inlined_call_operand.vmem [shape: bf16[64,32], index: 4, kind: input, shape index: {}]
  %s5 = inlined_call_operand.vmem [shape: f32[1,32], index: 5, kind: input, shape index: {}]
  %s6 = inlined_call_operand.vmem [shape: f32[1,32], index: 6, kind: input, shape index: {}]
  %s7 = inlined_call_operand.vmem [shape: f32[1,32], index: 7, kind: input, shape index: {}]
  %s8 = inlined_call_operand.vmem [shape: f32[1,128], index: 8, kind: output, shape index: {}]
  %s9 = sld [smem:[#allocation0]]
  $region42: #{decoder_forward.5} parent=0
    _
  %s11 = ssub.s32 1, %s9
  %s12 = scalar_select 0, %s11, %s9
  // Predicated region
  $region2: #{decoder_forward.5} parent=0 // pred_check
    _
  $region3: #{decoder_forward.5} parent=0 // pred_check_branch
    %14 = sbr.rel (0) target = $region5
  $region4: #{decoder_forward.5} parent=0 // pred_region
    _
  $region5: #{decoder_forward.5} parent=0 // pred_fallthru
    _
  // Predicated region
  $region6: #{decoder_forward.5} parent=0 // pred_check
    _
  $region7: #{decoder_forward.5} parent=0 // pred_check_branch
    %16 = sbr.rel (0) target = $region9
  $region8: #{decoder_forward.5} parent=0 // pred_region
    _
  $region9: #{decoder_forward.5} parent=0 // pred_fallthru
    _
  // Predicated region
  $region10: #{decoder_forward.5} parent=0 // pred_check
    _
  $region11: #{decoder_forward.5} parent=0 // pred_check_branch
    %18 = sbr.rel (0) target = $region13
  $region12: #{decoder_forward.5} parent=0 // pred_region
    _
  $region13: #{decoder_forward.5} parent=0 // pred_fallthru
    _
  // Predicated region
  $region14: #{decoder_forward.5} parent=0 // pred_check
    _
  $region15: #{decoder_forward.5} parent=0 // pred_check_branch
    %20 = sbr.rel (0) target = $region17
  $region16: #{decoder_forward.5} parent=0 // pred_region
    _
  $region17: #{decoder_forward.5} parent=0 // pred_fallthru
    _
  // Predicated region
  $region18: #{decoder_forward.5} parent=0 // pred_check
    _
  $region19: #{decoder_forward.5} parent=0 // pred_check_branch
    %22 = sbr.rel (0) target = $region21
  $region20: #{decoder_forward.5} parent=0 // pred_region
    _
  $region21: #{decoder_forward.5} parent=0 // pred_fallthru
    _
  // Predicated region
  $region22: #{decoder_forward.5} parent=0 // pred_check
    _
  $region23: #{decoder_forward.5} parent=0 // pred_check_branch
    %24 = sbr.rel (0) target = $region25
  $region24: #{decoder_forward.5} parent=0 // pred_region
    _
  $region25: #{decoder_forward.5} parent=0 // pred_fallthru
    _
  // Predicated region
  $region26: #{decoder_forward.5} parent=0 // pred_check
    _
  $region27: #{decoder_forward.5} parent=0 // pred_check_branch
    %26 = sbr.rel (0) target = $region29
  $region28: #{decoder_forward.5} parent=0 // pred_region
    _
  $region29: #{decoder_forward.5} parent=0 // pred_fallthru
    _
  // Predicated region
  $region30: #{decoder_forward.5} parent=0 // pred_check
    _
  $region31: #{decoder_forward.5} parent=0 // pred_check_branch
    %28 = sbr.rel (0) target = $region33
  $region32: #{decoder_forward.5} parent=0 // pred_region
    _
  $region33: #{decoder_forward.5} parent=0 // pred_fallthru
    _
  %v30 = vld [vmem:[%s0] sm:$0xf]
  %v31 = vld [vmem:[%s0 + $0x4] sm:$0xf]
  %v32 = vld [vmem:[%s0 + $0x8] sm:$0xf]
  %v33 = vld [vmem:[%s0 + $0xc] sm:$0xf]
  %v34 = vld [vmem:[%s0 + $0x10] sm:$0xf]
  %v35 = vld [vmem:[%s0 + $0x14] sm:$0xf]
  %v36 = vld [vmem:[%s0 + $0x18] sm:$0xf]
  %v37 = vld [vmem:[%s0 + $0x1c] sm:$0xf]
  %v38 = vld [vmem:[%s0 + $0x20] sm:$0xf]
  %v39 = vld [vmem:[%s0 + $0x24] sm:$0xf]
  %v40 = vld [vmem:[%s0 + $0x28] sm:$0xf]
  %v41 = vld [vmem:[%s0 + $0x2c] sm:$0xf]
  %v42 = vld [vmem:[%s0 + $0x30] sm:$0xf]
  %v43 = vld [vmem:[%s0 + $0x34] sm:$0xf]
  %v44 = vld [vmem:[%s0 + $0x38] sm:$0xf]
  %v45 = vld [vmem:[%s0 + $0x3c] sm:$0xf]
  %v46 = vld [vmem:[%s1] sm:$0xf]
  %v47 = vld [vmem:[%s1 + $0x4] sm:$0xf]
  %v48 = vld [vmem:[%s1 + $0x8] sm:$0xf]
  %v49 = vld [vmem:[%s1 + $0xc] sm:$0xf]
  %v50 = vld [vmem:[%s1 + $0x10] sm:$0xf]
  %v51 = vld [vmem:[%s1 + $0x14] sm:$0xf]
  %v52 = vld [vmem:[%s1 + $0x18] sm:$0xf]
  %v53 = vld [vmem:[%s1 + $0x1c] sm:$0xf]
  %v54 = vld [vmem:[%s1 + $0x20] sm:$0xf]
  %v55 = vld [vmem:[%s1 + $0x24] sm:$0xf]
  %v56 = vld [vmem:[%s1 + $0x28] sm:$0xf]
  %v57 = vld [vmem:[%s1 + $0x2c] sm:$0xf]
  %v58 = vld [vmem:[%s1 + $0x30] sm:$0xf]
  %v59 = vld [vmem:[%s1 + $0x34] sm:$0xf]
  %v60 = vld [vmem:[%s1 + $0x38] sm:$0xf]
  %v61 = vld [vmem:[%s1 + $0x3c] sm:$0xf]
  %v78 = vunpack.c.l.b16 %v30
  %v79 = vunpack.c.l.b16 %v31
  %v80 = vunpack.c.l.b16 %v32
  %v81 = vunpack.c.l.b16 %v33
  %v82 = vunpack.c.l.b16 %v34
  %v83 = vunpack.c.l.b16 %v35
  %v84 = vunpack.c.l.b16 %v36
  %v85 = vunpack.c.l.b16 %v37
  %v86 = vunpack.c.l.b16 %v38
  %v87 = vunpack.c.l.b16 %v39
  %v88 = vunpack.c.l.b16 %v40
  %v89 = vunpack.c.l.b16 %v41
  %v90 = vunpack.c.l.b16 %v42
  %v91 = vunpack.c.l.b16 %v43
  %v92 = vunpack.c.l.b16 %v44
  %v93 = vunpack.c.l.b16 %v45
  %v94 = vpack.c.b16 %v79, %v78
  %v95 = vpack.c.b16 %v81, %v80
  %v96 = vpack.c.b16 %v83, %v82
  %v97 = vpack.c.b16 %v85, %v84
  %v98 = vpack.c.b16 %v87, %v86
  %v99 = vpack.c.b16 %v89, %v88
  %v100 = vpack.c.b16 %v91, %v90
  %v101 = vpack.c.b16 %v93, %v92
  %v126 = vunpack.c.l.b16 %v46
  %v127 = vunpack.c.l.b16 %v47
  %v128 = vunpack.c.l.b16 %v48
  %v129 = vunpack.c.l.b16 %v49
  %v130 = vunpack.c.l.b16 %v50
  %v131 = vunpack.c.l.b16 %v51
  %v132 = vunpack.c.l.b16 %v52
  %v133 = vunpack.c.l.b16 %v53
  %v134 = vunpack.c.l.b16 %v54
  %v135 = vunpack.c.l.b16 %v55
  %v136 = vunpack.c.l.b16 %v56
  %v137 = vunpack.c.l.b16 %v57
  %v138 = vunpack.c.l.b16 %v58
  %v139 = vunpack.c.l.b16 %v59
  %v140 = vunpack.c.l.b16 %v60
  %v141 = vunpack.c.l.b16 %v61
  %v142 = vpack.c.b16 %v127, %v126
  %v143 = vpack.c.b16 %v129, %v128
  %v144 = vpack.c.b16 %v131, %v130
  %v145 = vpack.c.b16 %v133, %v132
  %v146 = vpack.c.b16 %v135, %v134
  %v147 = vpack.c.b16 %v137, %v136
  %v148 = vpack.c.b16 %v139, %v138
  %v149 = vpack.c.b16 %v141, %v140
  %158 = vmatprep.subr.bf16.mxu0 0
  %159 = vmatpush1.bf16.msra.mxu0 %v142
  %160 = vmatprep.subr.bf16.mxu0 0
  %161 = vmatpush1.bf16.msra.mxu0 %v143
  %162 = vmatprep.subr.bf16.mxu0 0
  %163 = vmatpush1.bf16.msra.mxu0 %v144
  %164 = vmatprep.subr.bf16.mxu0 0
  %165 = vmatpush1.bf16.msra.mxu0 %v145
  %166 = vmatprep.subr.bf16.mxu0 0
  %167 = vmatpush1.bf16.msra.mxu0 %v146
  %168 = vmatprep.subr.bf16.mxu0 0
  %169 = vmatpush1.bf16.msra.mxu0 %v147
  %170 = vmatprep.subr.bf16.mxu0 0
  %171 = vmatpush1.bf16.msra.mxu0 %v148
  %172 = vmatprep.subr.bf16.mxu0 0
  %173 = vmatpush1.bf16.msra.mxu0 %v149
  %174 = vmatprep.subr.bf16.mxu0 0
  %175 = vmatpush1.bf16.msra.mxu0 0
  %176 = vmatprep.subr.bf16.mxu0 0
  %177 = vmatpush1.bf16.msra.mxu0 0
  %178 = vmatprep.subr.bf16.mxu0 0
  %179 = vmatpush1.bf16.msra.mxu0 0
  %180 = vmatprep.subr.bf16.mxu0 0
  %181 = vmatpush1.bf16.msra.mxu0 0
  %182 = vmatprep.subr.bf16.mxu0 0
  %183 = vmatpush1.bf16.msra.mxu0 0
  %184 = vmatprep.subr.bf16.mxu0 0
  %185 = vmatpush1.bf16.msra.mxu0 0
  %186 = vmatprep.subr.bf16.mxu0 0
  %187 = vmatpush1.bf16.msra.mxu0 0
  %188 = vmatprep.subr.bf16.mxu0 0
  %189 = vmatpush1.bf16.msra.mxu0 0
  %190 = vmatprep.mubr.bf16.mxu0 0
  %191 = vmatmul.mubr.bf16.gmra.mrb[0].mxu0 %v94
  %v192 = vpop.f32.mrb[0].mxu0
  %v193 = vadd.f32 0.0, %v192
  %v194 = vpop.f32.mrb[0].mxu0
  %v195 = vpop.f32.mrb[0].mxu0
  %v196 = vadd.f32 0.0, %v195
  %v197 = vpop.f32.mrb[0].mxu0
  %198 = vmatprep.mubr.bf16.mxu0 0
  %199 = vmatmul.mubr.bf16.gmra.mrb[0].mxu0 %v95
  %v200 = vpop.f32.mrb[0].mxu0
  %v201 = vadd.f32 0.0, %v200
  %v202 = vpop.f32.mrb[0].mxu0
  %v203 = vpop.f32.mrb[0].mxu0
  %v204 = vadd.f32 0.0, %v203
  %v205 = vpop.f32.mrb[0].mxu0
  %206 = vmatprep.mubr.bf16.mxu0 0
  %207 = vmatmul.mubr.bf16.gmra.mrb[0].mxu0 %v96
  %v208 = vpop.f32.mrb[0].mxu0
  %v209 = vadd.f32 0.0, %v208
  %v210 = vpop.f32.mrb[0].mxu0
  %v211 = vpop.f32.mrb[0].mxu0
  %v212 = vadd.f32 0.0, %v211
  %v213 = vpop.f32.mrb[0].mxu0
  %214 = vmatprep.mubr.bf16.mxu0 0
  %215 = vmatmul.mubr.bf16.gmra.mrb[0].mxu0 %v97
  %v216 = vpop.f32.mrb[0].mxu0
  %v217 = vadd.f32 0.0, %v216
  %v218 = vpop.f32.mrb[0].mxu0
  %v219 = vpop.f32.mrb[0].mxu0
  %v220 = vadd.f32 0.0, %v219
  %v221 = vpop.f32.mrb[0].mxu0
  %222 = vmatprep.mubr.bf16.mxu0 0
  %223 = vmatmul.mubr.bf16.gmra.mrb[0].mxu0 %v98
  %v224 = vpop.f32.mrb[0].mxu0
  %v225 = vadd.f32 0.0, %v224
  %v226 = vpop.f32.mrb[0].mxu0
  %v227 = vpop.f32.mrb[0].mxu0
  %v228 = vadd.f32 0.0, %v227
  %v229 = vpop.f32.mrb[0].mxu0
  %230 = vmatprep.mubr.bf16.mxu0 0
  %231 = vmatmul.mubr.bf16.gmra.mrb[0].mxu0 %v99
  %v232 = vpop.f32.mrb[0].mxu0
  %v233 = vadd.f32 0.0, %v232
  %v234 = vpop.f32.mrb[0].mxu0
  %v235 = vpop.f32.mrb[0].mxu0
  %v236 = vadd.f32 0.0, %v235
  %v237 = vpop.f32.mrb[0].mxu0
  %238 = vmatprep.mubr.bf16.mxu0 0
  %239 = vmatmul.mubr.bf16.gmra.mrb[0].mxu0 %v100
  %v240 = vpop.f32.mrb[0].mxu0
  %v241 = vadd.f32 0.0, %v240
  %v242 = vpop.f32.mrb[0].mxu0
  %v243 = vpop.f32.mrb[0].mxu0
  %v244 = vadd.f32 0.0, %v243
  %v245 = vpop.f32.mrb[0].mxu0
  %246 = vmatprep.mubr.bf16.mxu0 0
  %247 = vmatmul.mubr.bf16.gmra.mrb[0].mxu0 %v101
  %v248 = vpop.f32.mrb[0].mxu0
  %v249 = vadd.f32 0.0, %v248
  %v250 = vpop.f32.mrb[0].mxu0
  %v251 = vpop.f32.mrb[0].mxu0
  %v252 = vadd.f32 0.0, %v251
  %v253 = vpop.f32.mrb[0].mxu0
  %254 = vdwg.mxu0
  %v255 = vld [vmem:[%s2] sm:$0x1]
  %v257 = vlaneseq
  %v258 = vshrl.u32 %v257, 7
  %v259 = vsub.s32 0, %v258
  %v260 = vrot.slane %v255, %v259
  %v262 = vmul.f32 %v193, %v260
  %v263 = vmul.f32 %v196, %v260
  %v264 = vmul.f32 %v201, %v260
  %v265 = vmul.f32 %v204, %v260
  %v266 = vmul.f32 %v209, %v260
  %v267 = vmul.f32 %v212, %v260
  %v268 = vmul.f32 %v217, %v260
  %v269 = vmul.f32 %v220, %v260
  %v270 = vmul.f32 %v225, %v260
  %v271 = vmul.f32 %v228, %v260
  %v272 = vmul.f32 %v233, %v260
  %v273 = vmul.f32 %v236, %v260
  %v274 = vmul.f32 %v241, %v260
  %v275 = vmul.f32 %v244, %v260
  %v276 = vmul.f32 %v249, %v260
  %v277 = vmul.f32 %v252, %v260
  %v278 = vld [vmem:[%s3] sm:$0x1]
  %v280 = vlaneseq
  %v281 = vshrl.u32 %v280, 7
  %v282 = vsub.s32 0, %v281
  %v283 = vrot.slane %v278, %v282
  %v285 = vadd.f32 %v262, %v283
  %v286 = vadd.f32 %v263, %v283
  %v287 = vadd.f32 %v264, %v283
  %v288 = vadd.f32 %v265, %v283
  %v289 = vadd.f32 %v266, %v283
  %v290 = vadd.f32 %v267, %v283
  %v291 = vadd.f32 %v268, %v283
  %v292 = vadd.f32 %v269, %v283
  %v293 = vadd.f32 %v270, %v283
  %v294 = vadd.f32 %v271, %v283
  %v295 = vadd.f32 %v272, %v283
  %v296 = vadd.f32 %v273, %v283
  %v297 = vadd.f32 %v274, %v283
  %v298 = vadd.f32 %v275, %v283
  %v299 = vadd.f32 %v276, %v283
  %v300 = vadd.f32 %v277, %v283
  %v301 = vmax.f32 %v285, 0.0
  %v302 = vmax.f32 %v286, 0.0
  %v303 = vmax.f32 %v287, 0.0
  %v304 = vmax.f32 %v288, 0.0
  %v305 = vmax.f32 %v289, 0.0
  %v306 = vmax.f32 %v290, 0.0
  %v307 = vmax.f32 %v291, 0.0
  %v308 = vmax.f32 %v292, 0.0
  %v309 = vmax.f32 %v293, 0.0
  %v310 = vmax.f32 %v294, 0.0
  %v311 = vmax.f32 %v295, 0.0
  %v312 = vmax.f32 %v296, 0.0
  %v313 = vmax.f32 %v297, 0.0
  %v314 = vmax.f32 %v298, 0.0
  %v315 = vmax.f32 %v299, 0.0
  %v316 = vmax.f32 %v300, 0.0
  %v317 = vpack.c.bf16 %v302, %v301
  %v318 = vpack.c.bf16 %v304, %v303
  %v319 = vpack.c.bf16 %v306, %v305
  %v320 = vpack.c.bf16 %v308, %v307
  %v321 = vpack.c.bf16 %v310, %v309
  %v322 = vpack.c.bf16 %v312, %v311
  %v323 = vpack.c.bf16 %v314, %v313
  %v324 = vpack.c.bf16 %v316, %v315
  %v325 = vld [vmem:[%s4] sm:$0xf]
  %v326 = vld [vmem:[%s4 + $0x4] sm:$0xf]
  %v327 = vld [vmem:[%s4 + $0x8] sm:$0xf]
  %v328 = vld [vmem:[%s4 + $0xc] sm:$0xf]
  %v329 = vld [vmem:[%s4 + $0x10] sm:$0xf]
  %v330 = vld [vmem:[%s4 + $0x14] sm:$0xf]
  %v331 = vld [vmem:[%s4 + $0x18] sm:$0xf]
  %v332 = vld [vmem:[%s4 + $0x1c] sm:$0xf]
  %v341 = vunpack.c.l.b16 %v325
  %v342 = vunpack.c.l.b16 %v326
  %v343 = vunpack.c.l.b16 %v327
  %v344 = vunpack.c.l.b16 %v328
  %v345 = vunpack.c.l.b16 %v329
  %v346 = vunpack.c.l.b16 %v330
  %v347 = vunpack.c.l.b16 %v331
  %v348 = vunpack.c.l.b16 %v332
  %v349 = vpack.c.b16 %v342, %v341
  %v350 = vpack.c.b16 %v344, %v343
  %v351 = vpack.c.b16 %v346, %v345
  %v352 = vpack.c.b16 %v348, %v347
  %vm357 = vcmask 523264
  %v359 = vsel %vm357, %v317, 0
  %v362 = vsel %vm357, %v318, 0
  %v365 = vsel %vm357, %v319, 0
  %v368 = vsel %vm357, %v320, 0
  %v371 = vsel %vm357, %v321, 0
  %v374 = vsel %vm357, %v322, 0
  %v377 = vsel %vm357, %v323, 0
  %v380 = vsel %vm357, %v324, 0
  %382 = vmatprep.subr.bf16.mxu0 0
  %383 = vmatpush1.bf16.msra.mxu0 %v349
  %384 = vmatprep.subr.bf16.mxu0 0
  %385 = vmatpush1.bf16.msra.mxu0 %v350
  %386 = vmatprep.subr.bf16.mxu0 0
  %387 = vmatpush1.bf16.msra.mxu0 %v351
  %388 = vmatprep.subr.bf16.mxu0 0
  %389 = vmatpush1.bf16.msra.mxu0 %v352
  %390 = vmatprep.subr.bf16.mxu0 0
  %391 = vmatpush1.bf16.msra.mxu0 0
  %392 = vmatprep.subr.bf16.mxu0 0
  %393 = vmatpush1.bf16.msra.mxu0 0
  %394 = vmatprep.subr.bf16.mxu0 0
  %395 = vmatpush1.bf16.msra.mxu0 0
  %396 = vmatprep.subr.bf16.mxu0 0
  %397 = vmatpush1.bf16.msra.mxu0 0
  %398 = vmatprep.subr.bf16.mxu0 0
  %399 = vmatpush1.bf16.msra.mxu0 0
  %400 = vmatprep.subr.bf16.mxu0 0
  %401 = vmatpush1.bf16.msra.mxu0 0
  %402 = vmatprep.subr.bf16.mxu0 0
  %403 = vmatpush1.bf16.msra.mxu0 0
  %404 = vmatprep.subr.bf16.mxu0 0
  %405 = vmatpush1.bf16.msra.mxu0 0
  %406 = vmatprep.subr.bf16.mxu0 0
  %407 = vmatpush1.bf16.msra.mxu0 0
  %408 = vmatprep.subr.bf16.mxu0 0
  %409 = vmatpush1.bf16.msra.mxu0 0
  %410 = vmatprep.subr.bf16.mxu0 0
  %411 = vmatpush1.bf16.msra.mxu0 0
  %412 = vmatprep.subr.bf16.mxu0 0
  %413 = vmatpush1.bf16.msra.mxu0 0
  %414 = vmatprep.mubr.bf16.mxu0 0
  %415 = vmatmul.mubr.bf16.gmra.mrb[0].mxu0 %v359
  %v416 = vpop.f32.mrb[0].mxu0
  %v417 = vadd.f32 0.0, %v416
  %v418 = vpop.f32.mrb[0].mxu0
  %v419 = vpop.f32.mrb[0].mxu0
  %v420 = vadd.f32 0.0, %v419
  %v421 = vpop.f32.mrb[0].mxu0
  %422 = vmatprep.mubr.bf16.mxu0 0
  %423 = vmatmul.mubr.bf16.gmra.mrb[0].mxu0 %v362
  %v424 = vpop.f32.mrb[0].mxu0
  %v425 = vadd.f32 0.0, %v424
  %v426 = vpop.f32.mrb[0].mxu0
  %v427 = vpop.f32.mrb[0].mxu0
  %v428 = vadd.f32 0.0, %v427
  %v429 = vpop.f32.mrb[0].mxu0
  %430 = vmatprep.mubr.bf16.mxu0 0
  %431 = vmatmul.mubr.bf16.gmra.mrb[0].mxu0 %v365
  %v432 = vpop.f32.mrb[0].mxu0
  %v433 = vadd.f32 0.0, %v432
  %v434 = vpop.f32.mrb[0].mxu0
  %v435 = vpop.f32.mrb[0].mxu0
  %v436 = vadd.f32 0.0, %v435
  %v437 = vpop.f32.mrb[0].mxu0
  %438 = vmatprep.mubr.bf16.mxu0 0
  %439 = vmatmul.mubr.bf16.gmra.mrb[0].mxu0 %v368
  %v440 = vpop.f32.mrb[0].mxu0
  %v441 = vadd.f32 0.0, %v440
  %v442 = vpop.f32.mrb[0].mxu0
  %v443 = vpop.f32.mrb[0].mxu0
  %v444 = vadd.f32 0.0, %v443
  %v445 = vpop.f32.mrb[0].mxu0
  %446 = vmatprep.mubr.bf16.mxu0 0
  %447 = vmatmul.mubr.bf16.gmra.mrb[0].mxu0 %v371
  %v448 = vpop.f32.mrb[0].mxu0
  %v449 = vadd.f32 0.0, %v448
  %v450 = vpop.f32.mrb[0].mxu0
  %v451 = vpop.f32.mrb[0].mxu0
  %v452 = vadd.f32 0.0, %v451
  %v453 = vpop.f32.mrb[0].mxu0
  %454 = vmatprep.mubr.bf16.mxu0 0
  %455 = vmatmul.mubr.bf16.gmra.mrb[0].mxu0 %v374
  %v456 = vpop.f32.mrb[0].mxu0
  %v457 = vadd.f32 0.0, %v456
  %v458 = vpop.f32.mrb[0].mxu0
  %v459 = vpop.f32.mrb[0].mxu0
  %v460 = vadd.f32 0.0, %v459
  %v461 = vpop.f32.mrb[0].mxu0
  %462 = vmatprep.mubr.bf16.mxu0 0
  %463 = vmatmul.mubr.bf16.gmra.mrb[0].mxu0 %v377
  %v464 = vpop.f32.mrb[0].mxu0
  %v465 = vadd.f32 0.0, %v464
  %v466 = vpop.f32.mrb[0].mxu0
  %v467 = vpop.f32.mrb[0].mxu0
  %v468 = vadd.f32 0.0, %v467
  %v469 = vpop.f32.mrb[0].mxu0
  %470 = vmatprep.mubr.bf16.mxu0 0
  %471 = vmatmul.mubr.bf16.gmra.mrb[0].mxu0 %v380
  %v472 = vpop.f32.mrb[0].mxu0
  %v473 = vadd.f32 0.0, %v472
  %v474 = vpop.f32.mrb[0].mxu0
  %v475 = vpop.f32.mrb[0].mxu0
  %v476 = vadd.f32 0.0, %v475
  %v477 = vpop.f32.mrb[0].mxu0
  %478 = vdwg.mxu0
  %v479 = vld [vmem:[%s5] sm:$0x1]
  %v481 = vlaneseq
  %v482 = vshrl.u32 %v481, 7
  %v483 = vsub.s32 0, %v482
  %v484 = vrot.slane %v479, %v483
  %v486 = vmul.f32 %v417, %v484
  %v487 = vmul.f32 %v420, %v484
  %v488 = vmul.f32 %v425, %v484
  %v489 = vmul.f32 %v428, %v484
  %v490 = vmul.f32 %v433, %v484
  %v491 = vmul.f32 %v436, %v484
  %v492 = vmul.f32 %v441, %v484
  %v493 = vmul.f32 %v444, %v484
  %v494 = vmul.f32 %v449, %v484
  %v495 = vmul.f32 %v452, %v484
  %v496 = vmul.f32 %v457, %v484
  %v497 = vmul.f32 %v460, %v484
  %v498 = vmul.f32 %v465, %v484
  %v499 = vmul.f32 %v468, %v484
  %v500 = vmul.f32 %v473, %v484
  %v501 = vmul.f32 %v476, %v484
  %v502 = vld [vmem:[%s6] sm:$0x1]
  %v504 = vlaneseq
  %v505 = vshrl.u32 %v504, 7
  %v506 = vsub.s32 0, %v505
  %v507 = vrot.slane %v502, %v506
  %v509 = vadd.f32 %v486, %v507
  %v510 = vadd.f32 %v487, %v507
  %v511 = vadd.f32 %v488, %v507
  %v512 = vadd.f32 %v489, %v507
  %v513 = vadd.f32 %v490, %v507
  %v514 = vadd.f32 %v491, %v507
  %v515 = vadd.f32 %v492, %v507
  %v516 = vadd.f32 %v493, %v507
  %v517 = vadd.f32 %v494, %v507
  %v518 = vadd.f32 %v495, %v507
  %v519 = vadd.f32 %v496, %v507
  %v520 = vadd.f32 %v497, %v507
  %v521 = vadd.f32 %v498, %v507
  %v522 = vadd.f32 %v499, %v507
  %v523 = vadd.f32 %v500, %v507
  %v524 = vadd.f32 %v501, %v507
  %v525 = vmax.f32 %v509, 0.0
  %v526 = vmax.f32 %v510, 0.0
  %v527 = vmax.f32 %v511, 0.0
  %v528 = vmax.f32 %v512, 0.0
  %v529 = vmax.f32 %v513, 0.0
  %v530 = vmax.f32 %v514, 0.0
  %v531 = vmax.f32 %v515, 0.0
  %v532 = vmax.f32 %v516, 0.0
  %v533 = vmax.f32 %v517, 0.0
  %v534 = vmax.f32 %v518, 0.0
  %v535 = vmax.f32 %v519, 0.0
  %v536 = vmax.f32 %v520, 0.0
  %v537 = vmax.f32 %v521, 0.0
  %v538 = vmax.f32 %v522, 0.0
  %v539 = vmax.f32 %v523, 0.0
  %v540 = vmax.f32 %v524, 0.0
  %v541 = vld [vmem:[%s7] sm:$0x1]
  %v543 = vlaneseq
  %v544 = vshrl.u32 %v543, 7
  %v545 = vsub.s32 0, %v544
  %v546 = vrot.slane %v541, %v545
  %v548 = vmul.f32 %v525, %v546
  %v549 = vmul.f32 %v526, %v546
  %v550 = vmul.f32 %v527, %v546
  %v551 = vmul.f32 %v528, %v546
  %v552 = vmul.f32 %v529, %v546
  %v553 = vmul.f32 %v530, %v546
  %v554 = vmul.f32 %v531, %v546
  %v555 = vmul.f32 %v532, %v546
  %v556 = vmul.f32 %v533, %v546
  %v557 = vmul.f32 %v534, %v546
  %v558 = vmul.f32 %v535, %v546
  %v559 = vmul.f32 %v536, %v546
  %v560 = vmul.f32 %v537, %v546
  %v561 = vmul.f32 %v538, %v546
  %v562 = vmul.f32 %v539, %v546
  %v563 = vmul.f32 %v540, %v546
  %vm564 = vcmask 261120
  %v565 = vsel %vm564, %v548, 0.0
  %566 = vadd.xlane.f32.xlu0 %v565
  %v567 = vpop.xlane.xlu0 %566
  %v568 = vsel %vm564, %v549, 0.0
  %569 = vadd.xlane.f32.xlu0 %v568
  %v570 = vpop.xlane.xlu0 %569
  %v571 = vsel %vm564, %v550, 0.0
  %572 = vadd.xlane.f32.xlu0 %v571
  %v573 = vpop.xlane.xlu0 %572
  %v574 = vsel %vm564, %v551, 0.0
  %575 = vadd.xlane.f32.xlu0 %v574
  %v576 = vpop.xlane.xlu0 %575
  %v577 = vsel %vm564, %v552, 0.0
  %578 = vadd.xlane.f32.xlu0 %v577
  %v579 = vpop.xlane.xlu0 %578
  %v580 = vsel %vm564, %v553, 0.0
  %581 = vadd.xlane.f32.xlu0 %v580
  %v582 = vpop.xlane.xlu0 %581
  %v583 = vsel %vm564, %v554, 0.0
  %584 = vadd.xlane.f32.xlu0 %v583
  %v585 = vpop.xlane.xlu0 %584
  %v586 = vsel %vm564, %v555, 0.0
  %587 = vadd.xlane.f32.xlu0 %v586
  %v588 = vpop.xlane.xlu0 %587
  %v589 = vsel %vm564, %v556, 0.0
  %590 = vadd.xlane.f32.xlu0 %v589
  %v591 = vpop.xlane.xlu0 %590
  %v592 = vsel %vm564, %v557, 0.0
  %593 = vadd.xlane.f32.xlu0 %v592
  %v594 = vpop.xlane.xlu0 %593
  %v595 = vsel %vm564, %v558, 0.0
  %596 = vadd.xlane.f32.xlu0 %v595
  %v597 = vpop.xlane.xlu0 %596
  %v598 = vsel %vm564, %v559, 0.0
  %599 = vadd.xlane.f32.xlu0 %v598
  %v600 = vpop.xlane.xlu0 %599
  %v601 = vsel %vm564, %v560, 0.0
  %602 = vadd.xlane.f32.xlu0 %v601
  %v603 = vpop.xlane.xlu0 %602
  %v604 = vsel %vm564, %v561, 0.0
  %605 = vadd.xlane.f32.xlu0 %v604
  %v606 = vpop.xlane.xlu0 %605
  %v607 = vsel %vm564, %v562, 0.0
  %608 = vadd.xlane.f32.xlu0 %v607
  %v609 = vpop.xlane.xlu0 %608
  %v610 = vsel %vm564, %v563, 0.0
  %611 = vadd.xlane.f32.xlu0 %v610
  %v612 = vpop.xlane.xlu0 %611
  %v629 = vlaneseq
  %v630 = vand.u32 %v629, 127
  %v631 = vlaneseq
  %v632 = vshrl.u32 %v631, 7
  %v633 = vsub.s32 %v630, %v632
  %v634 = vrot.slane %v567, %v633
  %v635 = vadd.s32 %v630, 4294967288
  %v636 = vlaneseq
  %v637 = vshrl.u32 %v636, 7
  %v638 = vsub.s32 %v635, %v637
  %v639 = vrot.slane %v570, %v638
  %vm640 = vcmask 130112
  %v641 = vsel %vm640, %v639, %v634
  %v642 = vadd.s32 %v630, 4294967280
  %v643 = vlaneseq
  %v644 = vshrl.u32 %v643, 7
  %v645 = vsub.s32 %v642, %v644
  %v646 = vrot.slane %v573, %v645
  %vm647 = vcmask 195712
  %v648 = vsel %vm647, %v646, %v641
  %v649 = vadd.s32 %v630, 4294967272
  %v650 = vlaneseq
  %v651 = vshrl.u32 %v650, 7
  %v652 = vsub.s32 %v649, %v651
  %v653 = vrot.slane %v576, %v652
  %vm654 = vcmask 261312
  %v655 = vsel %vm654, %v653, %v648
  %v656 = vadd.s32 %v630, 4294967264
  %v657 = vlaneseq
  %v658 = vshrl.u32 %v657, 7
  %v659 = vsub.s32 %v656, %v658
  %v660 = vrot.slane %v579, %v659
  %vm661 = vcmask 326912
  %v662 = vsel %vm661, %v660, %v655
  %v663 = vadd.s32 %v630, 4294967256
  %v664 = vlaneseq
  %v665 = vshrl.u32 %v664, 7
  %v666 = vsub.s32 %v663, %v665
  %v667 = vrot.slane %v582, %v666
  %vm668 = vcmask 392512
  %v669 = vsel %vm668, %v667, %v662
  %v670 = vadd.s32 %v630, 4294967248
  %v671 = vlaneseq
  %v672 = vshrl.u32 %v671, 7
  %v673 = vsub.s32 %v670, %v672
  %v674 = vrot.slane %v585, %v673
  %vm675 = vcmask 458112
  %v676 = vsel %vm675, %v674, %v669
  %v677 = vadd.s32 %v630, 4294967240
  %v678 = vlaneseq
  %v679 = vshrl.u32 %v678, 7
  %v680 = vsub.s32 %v677, %v679
  %v681 = vrot.slane %v588, %v680
  %vm682 = vcmask 523712
  %v683 = vsel %vm682, %v681, %v676
  %v684 = vadd.s32 %v630, 4294967232
  %v685 = vlaneseq
  %v686 = vshrl.u32 %v685, 7
  %v687 = vsub.s32 %v684, %v686
  %v688 = vrot.slane %v591, %v687
  %vm689 = vcmask 589312
  %v690 = vsel %vm689, %v688, %v683
  %v691 = vadd.s32 %v630, 4294967224
  %v692 = vlaneseq
  %v693 = vshrl.u32 %v692, 7
  %v694 = vsub.s32 %v691, %v693
  %v695 = vrot.slane %v594, %v694
  %vm696 = vcmask 654912
  %v697 = vsel %vm696, %v695, %v690
  %v698 = vadd.s32 %v630, 4294967216
  %v699 = vlaneseq
  %v700 = vshrl.u32 %v699, 7
  %v701 = vsub.s32 %v698, %v700
  %v702 = vrot.slane %v597, %v701
  %vm703 = vcmask 720512
  %v704 = vsel %vm703, %v702, %v697
  %v705 = vadd.s32 %v630, 4294967208
  %v706 = vlaneseq
  %v707 = vshrl.u32 %v706, 7
  %v708 = vsub.s32 %v705, %v707
  %v709 = vrot.slane %v600, %v708
  %vm710 = vcmask 786112
  %v711 = vsel %vm710, %v709, %v704
  %v712 = vadd.s32 %v630, 4294967200
  %v713 = vlaneseq
  %v714 = vshrl.u32 %v713, 7
  %v715 = vsub.s32 %v712, %v714
  %v716 = vrot.slane %v603, %v715
  %vm717 = vcmask 851712
  %v718 = vsel %vm717, %v716, %v711
  %v719 = vadd.s32 %v630, 4294967192
  %v720 = vlaneseq
  %v721 = vshrl.u32 %v720, 7
  %v722 = vsub.s32 %v719, %v721
  %v723 = vrot.slane %v606, %v722
  %vm724 = vcmask 917312
  %v725 = vsel %vm724, %v723, %v718
  %v726 = vadd.s32 %v630, 4294967184
  %v727 = vlaneseq
  %v728 = vshrl.u32 %v727, 7
  %v729 = vsub.s32 %v726, %v728
  %v730 = vrot.slane %v609, %v729
  %vm731 = vcmask 982912
  %v732 = vsel %vm731, %v730, %v725
  %v733 = vadd.s32 %v630, 4294967176
  %v734 = vlaneseq
  %v735 = vshrl.u32 %v734, 7
  %v736 = vsub.s32 %v733, %v735
  %v737 = vrot.slane %v612, %v736
  %vm738 = vcmask 1048512
  %v739 = vsel %vm738, %v737, %v732
  %741 = vst [vmem:[%s8] sm:$0x1] %v739
  // Predicated region
  $region34: #{decoder_forward.5} parent=0 // pred_check
    _
  $region35: #{decoder_forward.5} parent=0 // pred_check_branch
    %743 = sbr.rel (0) target = $region37
  $region36: #{decoder_forward.5} parent=0 // pred_region
    _
  $region37: #{decoder_forward.5} parent=0 // pred_fallthru
    _
  // Predicated region
  $region38: #{decoder_forward.5} parent=0 // pred_check
    _
  $region39: #{decoder_forward.5} parent=0 // pred_check_branch
    %745 = sbr.rel (0) target = $region41
  $region40: #{decoder_forward.5} parent=0 // pred_region
    _
  $region41: #{decoder_forward.5} parent=0 // pred_fallthru
    _

</llo_original>
